<compile_context>
chip_gen: v5e
topology: v5e:2x2
jax: 0.10.0
libtpu: 0.0.40
codegen_flags: <defaults>
</compile_context>

<pallas_src>
import functools

import jax
import jax.numpy as jnp
from jax.experimental import pallas as pl
from jax.experimental.pallas import tpu as pltpu


def _round_up(x: int, m: int) -> int:
    return ((x + m - 1) // m) * m


# ----------------------------- Pallas kernel --------------------------------
def _make_gru_kernel(num_layers: int, H_p: int, T_b: int, B_p: int,
                     seq_len: int, seq_padded: int):
    mask_time = (seq_padded != seq_len)

    def kernel(*refs):
        # refs = [x, (wih, whh, b_i, b_hn) * L, fc_w, fc_b, out,
        #         h_scr, max_scr, gi_scr, act_scr]
        x_ref = refs[0]
        layer_refs = refs[1:1 + 4 * num_layers]
        fc_w_ref = refs[1 + 4 * num_layers]
        fc_b_ref = refs[2 + 4 * num_layers]
        out_ref = refs[3 + 4 * num_layers]
        h_scr = refs[4 + 4 * num_layers]      # (L, B_p, H_p) f32
        max_scr = refs[5 + 4 * num_layers]    # (B_p, H_p) f32
        gi_scr = refs[6 + 4 * num_layers]     # (T_b*B_p, 3*H_p) f32
        act_scr = refs[7 + 4 * num_layers]    # (T_b*B_p, H_p) bf16

        blk = pl.program_id(0)
        nblk = pl.num_programs(0)

        @pl.when(blk == 0)
        def _init():
            h_scr[...] = jnp.zeros_like(h_scr)
            max_scr[...] = jnp.full_like(max_scr, -jnp.inf)

        x_blk = x_ref[...]                    # (T_b*B_p, E) bf16

        for l in range(num_layers):
            wih_ref, whh_ref, b_i_ref, b_hn_ref = layer_refs[4 * l:4 * l + 4]
            src = x_blk if l == 0 else act_scr[...]

            # Hoisted input projection: all T_b steps of this layer in ONE
            # MXU matmul (bf16 operands, f32 accumulate), biases pre-summed.
            gi_scr[...] = (
                jnp.dot(src, wih_ref[...], preferred_element_type=jnp.float32)
                + b_i_ref[...])

            whh = whh_ref[...]                # (H_p, 3*H_p) bf16
            b_hn = b_hn_ref[...]              # (1, H_p) f32
            is_top = (l == num_layers - 1)

            def step(t, carry, l=l, whh=whh, b_hn=b_hn, is_top=is_top):
                h_prev = h_scr[l]             # (B_p, H_p) f32
                gh = jnp.dot(h_prev.astype(jnp.bfloat16), whh,
                             preferred_element_type=jnp.float32)
                row = pl.multiple_of(t * B_p, B_p)
                gi = gi_scr[pl.ds(row, B_p), :]      # (B_p, 3*H_p)

                # gate slices are 128-lane aligned (H_p multiple of 128)
                r = jax.nn.sigmoid(gi[:, 0:H_p] + gh[:, 0:H_p])
                z = jax.nn.sigmoid(gi[:, H_p:2 * H_p] + gh[:, H_p:2 * H_p])
                n = jnp.tanh(gi[:, 2 * H_p:3 * H_p]
                             + r * (gh[:, 2 * H_p:3 * H_p] + b_hn))
                h_new = (1.0 - z) * n + z * h_prev
                h_scr[l] = h_new

                if not is_top:
                    act_scr[pl.ds(row, B_p), :] = h_new.astype(jnp.bfloat16)
                else:
                    upd = jnp.maximum(max_scr[...], jnp.tanh(h_new))
                    if mask_time:
                        gt = blk * T_b + t
                        upd = jnp.where(gt < seq_len, upd, max_scr[...])
                    max_scr[...] = upd
                return carry

            jax.lax.fori_loop(0, T_b, step, 0, unroll=True)

        @pl.when(blk == nblk - 1)
        def _finalize():
            pooled = jnp.tanh(max_scr[...])                    # (B_p, H_p) f32
            logit = jnp.dot(pooled.astype(jnp.bfloat16), fc_w_ref[...],
                            preferred_element_type=jnp.float32) + fc_b_ref[...]
            out_ref[...] = logit.astype(out_ref.dtype)

    return kernel


def _const2d(i):
    # shared constant index_map for all 2-D weights (no late-binding closures)
    return (0, 0)


# ------------------------------- wrapper -------------------------------------
def gru_model_forward(token_ids, embed_table, gru_params, fc_w, fc_b,
                      *, time_block=None):
    """GRU_model forward. token_ids: (batch, seq) int32 -> (batch, class_num)."""
    batch, seq = token_ids.shape
    E = embed_table.shape[1]
    H = gru_params[0][1].shape[0]
    C = fc_w.shape[1]
    L = len(gru_params)

    B_p = _round_up(batch, 8)          # sublane padding
    H_p = _round_up(H, 128)            # lane padding per gate
    C_p = _round_up(C, 128)            # lane-dense output
    T_b = min(seq, 8) if time_block is None else time_block
    S_p = _round_up(seq, T_b)
    num_blocks = S_p // T_b

    # --- glue: embedding gather straight into padded time-major flat layout ---
    tok = jnp.pad(token_ids, ((0, B_p - batch), (0, S_p - seq)))   # (B_p, S_p)
    tok_tm = jnp.transpose(tok).reshape(-1)                        # (S_p*B_p,)
    x_flat = jnp.take(embed_table, tok_tm, axis=0).astype(jnp.bfloat16)

    # --- weight prep: 128-lane gate slots, pre-summed biases, bf16 operands ---
    flat_w = []
    for l, (wih, whh, bih, bhh) in enumerate(gru_params):
        in_dim = wih.shape[0]
        in_p = in_dim if l == 0 else H_p
        wih_p = jnp.zeros((in_p, 3 * H_p), jnp.float32)
        whh_p = jnp.zeros((H_p, 3 * H_p), jnp.float32)
        b_i_p = jnp.zeros((1, 3 * H_p), jnp.float32)
        b_hn_p = jnp.zeros((1, H_p), jnp.float32)
        for g in range(3):
            wih_p = wih_p.at[:in_dim, g * H_p:g * H_p + H].set(
                wih[:, g * H:(g + 1) * H])
            whh_p = whh_p.at[:H, g * H_p:g * H_p + H].set(
                whh[:, g * H:(g + 1) * H])
        # r, z: bih+bhh pre-summed; n: bih only (bhh_n is multiplied by r).
        b_i_p = b_i_p.at[:, 0:H].set(bih[:, 0:H] + bhh[:, 0:H])
        b_i_p = b_i_p.at[:, H_p:H_p + H].set(bih[:, H:2 * H] + bhh[:, H:2 * H])
        b_i_p = b_i_p.at[:, 2 * H_p:2 * H_p + H].set(bih[:, 2 * H:3 * H])
        b_hn_p = b_hn_p.at[:, 0:H].set(bhh[:, 2 * H:3 * H])
        flat_w += [wih_p.astype(jnp.bfloat16), whh_p.astype(jnp.bfloat16),
                   b_i_p, b_hn_p]

    fc_w_p = jnp.zeros((H_p, C_p), jnp.float32).at[:H, :C].set(fc_w)
    fc_w_p = fc_w_p.astype(jnp.bfloat16)
    fc_b_p = jnp.zeros((1, C_p), jnp.float32).at[:, :C].set(fc_b)

    # --- Pallas call: sequential grid over time blocks ---
    in_specs = [pl.BlockSpec((T_b * B_p, E), lambda i: (i, 0))]
    for w in flat_w:
        in_specs.append(pl.BlockSpec(w.shape, _const2d))
    in_specs.append(pl.BlockSpec(fc_w_p.shape, _const2d))
    in_specs.append(pl.BlockSpec(fc_b_p.shape, _const2d))
    out_spec = pl.BlockSpec((B_p, C_p), _const2d)

    kernel = _make_gru_kernel(L, H_p, T_b, B_p, seq, S_p)

    out = pl.pallas_call(
        kernel,
        out_shape=jax.ShapeDtypeStruct((B_p, C_p), jnp.float32),
        grid_spec=pltpu.PrefetchScalarGridSpec(
            num_scalar_prefetch=0,
            grid=(num_blocks,),
            in_specs=in_specs,
            out_specs=out_spec,
            scratch_shapes=[
                pltpu.VMEM((L, B_p, H_p), jnp.float32),           # h per layer
                pltpu.VMEM((B_p, H_p), jnp.float32),              # running max
                pltpu.VMEM((T_b * B_p, 3 * H_p), jnp.float32),    # gi per block
                pltpu.VMEM((T_b * B_p, H_p), jnp.bfloat16),       # layer acts
            ],
        ),
        compiler_params=pltpu.CompilerParams(
            dimension_semantics=("arbitrary",),
            vmem_limit_bytes=32 * 1024 * 1024),
    )(x_flat, *flat_w, fc_w_p, fc_b_p)

    return out[:batch, :C]


# ------------------------- pure-JAX references --------------------------------
def gru_model_reference(token_ids, embed_table, gru_params, fc_w, fc_b,
                        matmul_dtype=jnp.float32):
    """Reference forward. matmul_dtype=bfloat16 mirrors the kernel's MXU casts."""
    x = embed_table[token_ids].astype(jnp.float32)    # (batch, seq, E)
    x = jnp.transpose(x, (1, 0, 2))                   # (seq, batch, E)
    layer_in = x
    for (wih, whh, bih, bhh) in gru_params:
        H = whh.shape[0]

        def step(h, xt, wih=wih, whh=whh, bih=bih, bhh=bhh, H=H):
            gi = jnp.dot(xt.astype(matmul_dtype), wih.astype(matmul_dtype),
                         preferred_element_type=jnp.float32) + bih
            gh = jnp.dot(h.astype(matmul_dtype), whh.astype(matmul_dtype),
                         preferred_element_type=jnp.float32) + bhh
            r = jax.nn.sigmoid(gi[:, :H] + gh[:, :H])
            z = jax.nn.sigmoid(gi[:, H:2 * H] + gh[:, H:2 * H])
            n = jnp.tanh(gi[:, 2 * H:] + r * gh[:, 2 * H:])
            hn = (1.0 - z) * n + z * h
            return hn, hn

        h0 = jnp.zeros((x.shape[1], H), jnp.float32)
        _, layer_in = jax.lax.scan(step, h0, layer_in)
    out = jnp.tanh(jnp.transpose(layer_in, (1, 2, 0)))   # (batch, H, seq)
    pooled = jnp.tanh(jnp.max(out, axis=-1))              # max_pool1d over seq
    return jnp.dot(pooled.astype(matmul_dtype), fc_w.astype(matmul_dtype),
                   preferred_element_type=jnp.float32) + fc_b


# --------------------------------- main ---------------------------------------
if __name__ == "__main__":
    embed_num = 50      # vocabulary size
    embed_dim = 16
    hidden_dim = 32
    num_layers = 2
    class_num = 4
    batch = 2
    seq = 8

    key = jax.random.PRNGKey(0)
    keys = jax.random.split(key, 4 * num_layers + 4)

    embed_table = 0.1 * jax.random.normal(keys[0], (embed_num, embed_dim),
                                          dtype=jnp.float32)

    gru_params = []
    k_idx = 1
    scale = 1.0 / jnp.sqrt(hidden_dim)
    for l in range(num_layers):
        in_dim = embed_dim if l == 0 else hidden_dim
        wih = scale * jax.random.normal(keys[k_idx + 0], (in_dim, 3 * hidden_dim),
                                        dtype=jnp.float32)
        whh = scale * jax.random.normal(keys[k_idx + 1], (hidden_dim, 3 * hidden_dim),
                                        dtype=jnp.float32)
        bih = scale * jax.random.normal(keys[k_idx + 2], (1, 3 * hidden_dim),
                                        dtype=jnp.float32)
        bhh = scale * jax.random.normal(keys[k_idx + 3], (1, 3 * hidden_dim),
                                        dtype=jnp.float32)
        gru_params.append((wih, whh, bih, bhh))
        k_idx += 4

    fc_w = scale * jax.random.normal(keys[k_idx], (hidden_dim, class_num),
                                     dtype=jnp.float32)
    fc_b = scale * jax.random.normal(keys[k_idx + 1], (1, class_num),
                                     dtype=jnp.float32)

    token_ids = jax.random.randint(keys[k_idx + 2], (batch, seq), 0, embed_num,
                                   dtype=jnp.int32)

    fwd = jax.jit(functools.partial(gru_model_forward, time_block=4))
    logits = jax.block_until_ready(fwd(token_ids, embed_table, gru_params,
                                       fc_w, fc_b))

    # Reference mirroring the kernel's bf16 MXU casts (tight tolerance) ...
    ref_bf16 = jax.block_until_ready(
        gru_model_reference(token_ids, embed_table, gru_params, fc_w, fc_b,
                            matmul_dtype=jnp.bfloat16))
    # ... and the pure-f32 module semantics (bf16-level tolerance).
    ref_f32 = jax.block_until_ready(
        gru_model_reference(token_ids, embed_table, gru_params, fc_w, fc_b,
                            matmul_dtype=jnp.float32))

    assert logits.shape == (batch, class_num)
    assert jnp.allclose(logits, ref_bf16, atol=5e-3, rtol=5e-3), (
        f"bf16-matched mismatch:\n{logits}\nvs\n{ref_bf16}")
    assert jnp.allclose(logits, ref_f32, atol=5e-2, rtol=5e-2), (
        f"f32 mismatch:\n{logits}\nvs\n{ref_f32}")

    print("KERNEL_OK")
</pallas_src>

<mosaic_0001>
module attributes {stable_mosaic.version = 11 : i64} {
  func.func @kernel(%arg0: i32, %arg1: memref<32x16xbf16, #tpu.memory_space<vmem>>, %arg2: memref<16x384xbf16, #tpu.memory_space<vmem>>, %arg3: memref<128x384xbf16, #tpu.memory_space<vmem>>, %arg4: memref<1x384xf32, #tpu.memory_space<vmem>>, %arg5: memref<1x128xf32, #tpu.memory_space<vmem>>, %arg6: memref<128x384xbf16, #tpu.memory_space<vmem>>, %arg7: memref<128x384xbf16, #tpu.memory_space<vmem>>, %arg8: memref<1x384xf32, #tpu.memory_space<vmem>>, %arg9: memref<1x128xf32, #tpu.memory_space<vmem>>, %arg10: memref<128x128xbf16, #tpu.memory_space<vmem>>, %arg11: memref<1x128xf32, #tpu.memory_space<vmem>>, %arg12: memref<8x128xf32, #tpu.memory_space<vmem>>, %arg13: memref<2x8x128xf32, #tpu.memory_space<vmem>>, %arg14: memref<8x128xf32, #tpu.memory_space<vmem>>, %arg15: memref<32x384xf32, #tpu.memory_space<vmem>>, %arg16: memref<32x128xbf16, #tpu.memory_space<vmem>>) attributes {dimension_semantics = [#tpu.dimension_semantics<arbitrary>], iteration_bounds = array<i64: 2>, scalar_prefetch = 0 : i64, scratch_operands = 4 : i64, tpu.core_type = #tpu.core_type<tc>, window_params = [{transform_indices = @transform_0, window_bounds = array<i64: 32, 16>}, {pipeline_mode = #tpu.pipeline_mode<synchronous>, transform_indices = @transform_1, window_bounds = array<i64: 16, 384>}, {pipeline_mode = #tpu.pipeline_mode<synchronous>, transform_indices = @transform_2, window_bounds = array<i64: 128, 384>}, {pipeline_mode = #tpu.pipeline_mode<synchronous>, transform_indices = @transform_3, window_bounds = array<i64: 1, 384>}, {pipeline_mode = #tpu.pipeline_mode<synchronous>, transform_indices = @transform_4, window_bounds = array<i64: 1, 128>}, {pipeline_mode = #tpu.pipeline_mode<synchronous>, transform_indices = @transform_5, window_bounds = array<i64: 128, 384>}, {pipeline_mode = #tpu.pipeline_mode<synchronous>, transform_indices = @transform_6, window_bounds = array<i64: 128, 384>}, {pipeline_mode = #tpu.pipeline_mode<synchronous>, transform_indices = @transform_7, window_bounds = array<i64: 1, 384>}, {pipeline_mode = #tpu.pipeline_mode<synchronous>, transform_indices = @transform_8, window_bounds = array<i64: 1, 128>}, {pipeline_mode = #tpu.pipeline_mode<synchronous>, transform_indices = @transform_9, window_bounds = array<i64: 128, 128>}, {pipeline_mode = #tpu.pipeline_mode<synchronous>, transform_indices = @transform_10, window_bounds = array<i64: 1, 128>}, {pipeline_mode = #tpu.pipeline_mode<synchronous>, transform_indices = @transform_11, window_bounds = array<i64: 8, 128>}]} {
    %c0_i32 = arith.constant 0 : i32
    %0 = arith.cmpi eq, %arg0, %c0_i32 : i32
    %1 = arith.extui %0 : i1 to i32
    %c0_i32_0 = arith.constant 0 : i32
    %2 = arith.cmpi ne, %1, %c0_i32_0 : i32
    scf.if %2 {
      %cst_147 = arith.constant 0.000000e+00 : f32
      %364 = vector.broadcast %cst_147 : f32 to vector<2x8x128xf32>
      %c0_148 = arith.constant 0 : index
      %c0_149 = arith.constant 0 : index
      %c0_150 = arith.constant 0 : index
      %365 = vector.load %arg13[%c0_148, %c0_149, %c0_150] : memref<2x8x128xf32, #tpu.memory_space<vmem>>, vector<2x8x128xf32>
      tpu.vector_store %arg13[%c0_148, %c0_149, %c0_150], %364 {strides = array<i32>} : memref<2x8x128xf32, #tpu.memory_space<vmem>>, vector<2x8x128xf32>,
      %cst_151 = arith.constant 0xFF800000 : f32
      %366 = vector.broadcast %cst_151 : f32 to vector<8x128xf32>
      %c0_152 = arith.constant 0 : index
      %c0_153 = arith.constant 0 : index
      %367 = vector.load %arg14[%c0_152, %c0_153] : memref<8x128xf32, #tpu.memory_space<vmem>>, vector<8x128xf32>
      tpu.vector_store %arg14[%c0_152, %c0_153], %366 {strides = array<i32>} : memref<8x128xf32, #tpu.memory_space<vmem>>, vector<8x128xf32>,
    } else {
    }
    %c0 = arith.constant 0 : index
    %c0_1 = arith.constant 0 : index
    %3 = vector.load %arg1[%c0, %c0_1] : memref<32x16xbf16, #tpu.memory_space<vmem>>, vector<32x16xbf16>
    %c0_2 = arith.constant 0 : index
    %c0_3 = arith.constant 0 : index
    %4 = vector.load %arg2[%c0_2, %c0_3] : memref<16x384xbf16, #tpu.memory_space<vmem>>, vector<16x384xbf16>
    %cst = arith.constant dense<0.000000e+00> : vector<32x384xf32>
    %5 = tpu.matmul %3, %4, %cst {dimension_numbers = #tpu.dot_dimension_numbers<[1], [0], [0], [1], [0, 0, 1, 1], [], []>} : vector<32x16xbf16>, vector<16x384xbf16>, vector<32x384xf32> -> vector<32x384xf32>
    %c0_4 = arith.constant 0 : index
    %c0_5 = arith.constant 0 : index
    %6 = vector.load %arg4[%c0_4, %c0_5] : memref<1x384xf32, #tpu.memory_space<vmem>>, vector<1x384xf32>
    %7 = vector.broadcast %6 : vector<1x384xf32> to vector<32x384xf32>
    %8 = arith.addf %5, %7 : vector<32x384xf32>
    %c0_6 = arith.constant 0 : index
    %c0_7 = arith.constant 0 : index
    %9 = vector.load %arg15[%c0_6, %c0_7] : memref<32x384xf32, #tpu.memory_space<vmem>>, vector<32x384xf32>
    tpu.vector_store %arg15[%c0_6, %c0_7], %8 {strides = array<i32>} : memref<32x384xf32, #tpu.memory_space<vmem>>, vector<32x384xf32>,
    %c0_8 = arith.constant 0 : index
    %c0_9 = arith.constant 0 : index
    %10 = vector.load %arg3[%c0_8, %c0_9] : memref<128x384xbf16, #tpu.memory_space<vmem>>, vector<128x384xbf16>
    %c0_10 = arith.constant 0 : index
    %c0_11 = arith.constant 0 : index
    %11 = vector.load %arg5[%c0_10, %c0_11] : memref<1x128xf32, #tpu.memory_space<vmem>>, vector<1x128xf32>
    %c0_i32_12 = arith.constant 0 : i32
    %c0_13 = arith.constant 0 : index
    %c0_14 = arith.constant 0 : index
    %c0_15 = arith.constant 0 : index
    %12 = vector.load %arg13[%c0_13, %c0_14, %c0_15] : memref<2x8x128xf32, #tpu.memory_space<vmem>>, vector<1x8x128xf32>
    %13 = vector.shape_cast %12 : vector<1x8x128xf32> to vector<8x128xf32>
    %14 = arith.truncf %13 : vector<8x128xf32> to vector<8x128xbf16>
    %cst_16 = arith.constant dense<0.000000e+00> : vector<8x384xf32>
    %15 = tpu.matmul %14, %10, %cst_16 {dimension_numbers = #tpu.dot_dimension_numbers<[1], [0], [0], [1], [0, 0, 1, 1], [], []>} : vector<8x128xbf16>, vector<128x384xbf16>, vector<8x384xf32> -> vector<8x384xf32>
    %c8_i32 = arith.constant 8 : i32
    %16 = arith.muli %c0_i32_12, %c8_i32 : i32
    %17 = tpu.assume_multiple %16, 8 : i32
    %18 = arith.index_cast %17 : i32 to index
    %c0_17 = arith.constant 0 : index
    %19 = vector.load %arg15[%18, %c0_17] : memref<32x384xf32, #tpu.memory_space<vmem>>, vector<8x384xf32>
    %20 = vector.extract_strided_slice %19 {offsets = [0, 0], sizes = [8, 128], strides = [1, 1]} : vector<8x384xf32> to vector<8x128xf32>
    %21 = vector.extract_strided_slice %15 {offsets = [0, 0], sizes = [8, 128], strides = [1, 1]} : vector<8x384xf32> to vector<8x128xf32>
    %22 = arith.addf %20, %21 : vector<8x128xf32>
    %23 = arith.negf %22 : vector<8x128xf32>
    %24 = math.exp %23 : vector<8x128xf32>
    %cst_18 = arith.constant 1.000000e+00 : f32
    %25 = vector.broadcast %cst_18 : f32 to vector<8x128xf32>
    %26 = arith.addf %25, %24 : vector<8x128xf32>
    %27 = arith.divf %25, %26 : vector<8x128xf32>
    %28 = vector.extract_strided_slice %19 {offsets = [0, 128], sizes = [8, 128], strides = [1, 1]} : vector<8x384xf32> to vector<8x128xf32>
    %29 = vector.extract_strided_slice %15 {offsets = [0, 128], sizes = [8, 128], strides = [1, 1]} : vector<8x384xf32> to vector<8x128xf32>
    %30 = arith.addf %28, %29 : vector<8x128xf32>
    %31 = arith.negf %30 : vector<8x128xf32>
    %32 = math.exp %31 : vector<8x128xf32>
    %cst_19 = arith.constant 1.000000e+00 : f32
    %33 = vector.broadcast %cst_19 : f32 to vector<8x128xf32>
    %34 = arith.addf %33, %32 : vector<8x128xf32>
    %35 = arith.divf %33, %34 : vector<8x128xf32>
    %36 = vector.extract_strided_slice %19 {offsets = [0, 256], sizes = [8, 128], strides = [1, 1]} : vector<8x384xf32> to vector<8x128xf32>
    %37 = vector.extract_strided_slice %15 {offsets = [0, 256], sizes = [8, 128], strides = [1, 1]} : vector<8x384xf32> to vector<8x128xf32>
    %38 = vector.broadcast %11 : vector<1x128xf32> to vector<8x128xf32>
    %39 = arith.addf %37, %38 : vector<8x128xf32>
    %40 = arith.mulf %27, %39 : vector<8x128xf32>
    %41 = arith.addf %36, %40 : vector<8x128xf32>
    %42 = math.tanh %41 : vector<8x128xf32>
    %cst_20 = arith.constant 1.000000e+00 : f32
    %43 = vector.broadcast %cst_20 : f32 to vector<8x128xf32>
    %44 = arith.subf %43, %35 : vector<8x128xf32>
    %45 = arith.mulf %44, %42 : vector<8x128xf32>
    %46 = arith.mulf %35, %13 : vector<8x128xf32>
    %47 = arith.addf %45, %46 : vector<8x128xf32>
    %c0_21 = arith.constant 0 : index
    %c0_22 = arith.constant 0 : index
    %c0_23 = arith.constant 0 : index
    %48 = vector.load %arg13[%c0_21, %c0_22, %c0_23] : memref<2x8x128xf32, #tpu.memory_space<vmem>>, vector<1x8x128xf32>
    %49 = vector.shape_cast %48 : vector<1x8x128xf32> to vector<8x128xf32>
    %50 = vector.shape_cast %47 : vector<8x128xf32> to vector<1x8x128xf32>
    tpu.vector_store %arg13[%c0_21, %c0_22, %c0_23], %50 {strides = array<i32>} : memref<2x8x128xf32, #tpu.memory_space<vmem>>, vector<1x8x128xf32>,
    %51 = arith.truncf %47 : vector<8x128xf32> to vector<8x128xbf16>
    %52 = arith.index_cast %17 : i32 to index
    %c0_24 = arith.constant 0 : index
    %53 = vector.load %arg16[%52, %c0_24] : memref<32x128xbf16, #tpu.memory_space<vmem>>, vector<8x128xbf16>
    tpu.vector_store %arg16[%52, %c0_24], %51 {strides = array<i32>} : memref<32x128xbf16, #tpu.memory_space<vmem>>, vector<8x128xbf16>,
    %c1_i32 = arith.constant 1 : i32
    %c0_25 = arith.constant 0 : index
    %c0_26 = arith.constant 0 : index
    %c0_27 = arith.constant 0 : index
    %54 = vector.load %arg13[%c0_25, %c0_26, %c0_27] : memref<2x8x128xf32, #tpu.memory_space<vmem>>, vector<1x8x128xf32>
    %55 = vector.shape_cast %54 : vector<1x8x128xf32> to vector<8x128xf32>
    %56 = arith.truncf %55 : vector<8x128xf32> to vector<8x128xbf16>
    %cst_28 = arith.constant dense<0.000000e+00> : vector<8x384xf32>
    %57 = tpu.matmul %56, %10, %cst_28 {dimension_numbers = #tpu.dot_dimension_numbers<[1], [0], [0], [1], [0, 0, 1, 1], [], []>} : vector<8x128xbf16>, vector<128x384xbf16>, vector<8x384xf32> -> vector<8x384xf32>
    %c8_i32_29 = arith.constant 8 : i32
    %58 = arith.muli %c1_i32, %c8_i32_29 : i32
    %59 = tpu.assume_multiple %58, 8 : i32
    %60 = arith.index_cast %59 : i32 to index
    %c0_30 = arith.constant 0 : index
    %61 = vector.load %arg15[%60, %c0_30] : memref<32x384xf32, #tpu.memory_space<vmem>>, vector<8x384xf32>
    %62 = vector.extract_strided_slice %61 {offsets = [0, 0], sizes = [8, 128], strides = [1, 1]} : vector<8x384xf32> to vector<8x128xf32>
    %63 = vector.extract_strided_slice %57 {offsets = [0, 0], sizes = [8, 128], strides = [1, 1]} : vector<8x384xf32> to vector<8x128xf32>
    %64 = arith.addf %62, %63 : vector<8x128xf32>
    %65 = arith.negf %64 : vector<8x128xf32>
    %66 = math.exp %65 : vector<8x128xf32>
    %cst_31 = arith.constant 1.000000e+00 : f32
    %67 = vector.broadcast %cst_31 : f32 to vector<8x128xf32>
    %68 = arith.addf %67, %66 : vector<8x128xf32>
    %69 = arith.divf %67, %68 : vector<8x128xf32>
    %70 = vector.extract_strided_slice %61 {offsets = [0, 128], sizes = [8, 128], strides = [1, 1]} : vector<8x384xf32> to vector<8x128xf32>
    %71 = vector.extract_strided_slice %57 {offsets = [0, 128], sizes = [8, 128], strides = [1, 1]} : vector<8x384xf32> to vector<8x128xf32>
    %72 = arith.addf %70, %71 : vector<8x128xf32>
    %73 = arith.negf %72 : vector<8x128xf32>
    %74 = math.exp %73 : vector<8x128xf32>
    %cst_32 = arith.constant 1.000000e+00 : f32
    %75 = vector.broadcast %cst_32 : f32 to vector<8x128xf32>
    %76 = arith.addf %75, %74 : vector<8x128xf32>
    %77 = arith.divf %75, %76 : vector<8x128xf32>
    %78 = vector.extract_strided_slice %61 {offsets = [0, 256], sizes = [8, 128], strides = [1, 1]} : vector<8x384xf32> to vector<8x128xf32>
    %79 = vector.extract_strided_slice %57 {offsets = [0, 256], sizes = [8, 128], strides = [1, 1]} : vector<8x384xf32> to vector<8x128xf32>
    %80 = vector.broadcast %11 : vector<1x128xf32> to vector<8x128xf32>
    %81 = arith.addf %79, %80 : vector<8x128xf32>
    %82 = arith.mulf %69, %81 : vector<8x128xf32>
    %83 = arith.addf %78, %82 : vector<8x128xf32>
    %84 = math.tanh %83 : vector<8x128xf32>
    %cst_33 = arith.constant 1.000000e+00 : f32
    %85 = vector.broadcast %cst_33 : f32 to vector<8x128xf32>
    %86 = arith.subf %85, %77 : vector<8x128xf32>
    %87 = arith.mulf %86, %84 : vector<8x128xf32>
    %88 = arith.mulf %77, %55 : vector<8x128xf32>
    %89 = arith.addf %87, %88 : vector<8x128xf32>
    %c0_34 = arith.constant 0 : index
    %c0_35 = arith.constant 0 : index
    %c0_36 = arith.constant 0 : index
    %90 = vector.load %arg13[%c0_34, %c0_35, %c0_36] : memref<2x8x128xf32, #tpu.memory_space<vmem>>, vector<1x8x128xf32>
    %91 = vector.shape_cast %90 : vector<1x8x128xf32> to vector<8x128xf32>
    %92 = vector.shape_cast %89 : vector<8x128xf32> to vector<1x8x128xf32>
    tpu.vector_store %arg13[%c0_34, %c0_35, %c0_36], %92 {strides = array<i32>} : memref<2x8x128xf32, #tpu.memory_space<vmem>>, vector<1x8x128xf32>,
    %93 = arith.truncf %89 : vector<8x128xf32> to vector<8x128xbf16>
    %94 = arith.index_cast %59 : i32 to index
    %c0_37 = arith.constant 0 : index
    %95 = vector.load %arg16[%94, %c0_37] : memref<32x128xbf16, #tpu.memory_space<vmem>>, vector<8x128xbf16>
    tpu.vector_store %arg16[%94, %c0_37], %93 {strides = array<i32>} : memref<32x128xbf16, #tpu.memory_space<vmem>>, vector<8x128xbf16>,
    %c2_i32 = arith.constant 2 : i32
    %c0_38 = arith.constant 0 : index
    %c0_39 = arith.constant 0 : index
    %c0_40 = arith.constant 0 : index
    %96 = vector.load %arg13[%c0_38, %c0_39, %c0_40] : memref<2x8x128xf32, #tpu.memory_space<vmem>>, vector<1x8x128xf32>
    %97 = vector.shape_cast %96 : vector<1x8x128xf32> to vector<8x128xf32>
    %98 = arith.truncf %97 : vector<8x128xf32> to vector<8x128xbf16>
    %cst_41 = arith.constant dense<0.000000e+00> : vector<8x384xf32>
    %99 = tpu.matmul %98, %10, %cst_41 {dimension_numbers = #tpu.dot_dimension_numbers<[1], [0], [0], [1], [0, 0, 1, 1], [], []>} : vector<8x128xbf16>, vector<128x384xbf16>, vector<8x384xf32> -> vector<8x384xf32>
    %c8_i32_42 = arith.constant 8 : i32
    %100 = arith.muli %c2_i32, %c8_i32_42 : i32
    %101 = tpu.assume_multiple %100, 8 : i32
    %102 = arith.index_cast %101 : i32 to index
    %c0_43 = arith.constant 0 : index
    %103 = vector.load %arg15[%102, %c0_43] : memref<32x384xf32, #tpu.memory_space<vmem>>, vector<8x384xf32>
    %104 = vector.extract_strided_slice %103 {offsets = [0, 0], sizes = [8, 128], strides = [1, 1]} : vector<8x384xf32> to vector<8x128xf32>
    %105 = vector.extract_strided_slice %99 {offsets = [0, 0], sizes = [8, 128], strides = [1, 1]} : vector<8x384xf32> to vector<8x128xf32>
    %106 = arith.addf %104, %105 : vector<8x128xf32>
    %107 = arith.negf %106 : vector<8x128xf32>
    %108 = math.exp %107 : vector<8x128xf32>
    %cst_44 = arith.constant 1.000000e+00 : f32
    %109 = vector.broadcast %cst_44 : f32 to vector<8x128xf32>
    %110 = arith.addf %109, %108 : vector<8x128xf32>
    %111 = arith.divf %109, %110 : vector<8x128xf32>
    %112 = vector.extract_strided_slice %103 {offsets = [0, 128], sizes = [8, 128], strides = [1, 1]} : vector<8x384xf32> to vector<8x128xf32>
    %113 = vector.extract_strided_slice %99 {offsets = [0, 128], sizes = [8, 128], strides = [1, 1]} : vector<8x384xf32> to vector<8x128xf32>
    %114 = arith.addf %112, %113 : vector<8x128xf32>
    %115 = arith.negf %114 : vector<8x128xf32>
    %116 = math.exp %115 : vector<8x128xf32>
    %cst_45 = arith.constant 1.000000e+00 : f32
    %117 = vector.broadcast %cst_45 : f32 to vector<8x128xf32>
    %118 = arith.addf %117, %116 : vector<8x128xf32>
    %119 = arith.divf %117, %118 : vector<8x128xf32>
    %120 = vector.extract_strided_slice %103 {offsets = [0, 256], sizes = [8, 128], strides = [1, 1]} : vector<8x384xf32> to vector<8x128xf32>
    %121 = vector.extract_strided_slice %99 {offsets = [0, 256], sizes = [8, 128], strides = [1, 1]} : vector<8x384xf32> to vector<8x128xf32>
    %122 = vector.broadcast %11 : vector<1x128xf32> to vector<8x128xf32>
    %123 = arith.addf %121, %122 : vector<8x128xf32>
    %124 = arith.mulf %111, %123 : vector<8x128xf32>
    %125 = arith.addf %120, %124 : vector<8x128xf32>
    %126 = math.tanh %125 : vector<8x128xf32>
    %cst_46 = arith.constant 1.000000e+00 : f32
    %127 = vector.broadcast %cst_46 : f32 to vector<8x128xf32>
    %128 = arith.subf %127, %119 : vector<8x128xf32>
    %129 = arith.mulf %128, %126 : vector<8x128xf32>
    %130 = arith.mulf %119, %97 : vector<8x128xf32>
    %131 = arith.addf %129, %130 : vector<8x128xf32>
    %c0_47 = arith.constant 0 : index
    %c0_48 = arith.constant 0 : index
    %c0_49 = arith.constant 0 : index
    %132 = vector.load %arg13[%c0_47, %c0_48, %c0_49] : memref<2x8x128xf32, #tpu.memory_space<vmem>>, vector<1x8x128xf32>
    %133 = vector.shape_cast %132 : vector<1x8x128xf32> to vector<8x128xf32>
    %134 = vector.shape_cast %131 : vector<8x128xf32> to vector<1x8x128xf32>
    tpu.vector_store %arg13[%c0_47, %c0_48, %c0_49], %134 {strides = array<i32>} : memref<2x8x128xf32, #tpu.memory_space<vmem>>, vector<1x8x128xf32>,
    %135 = arith.truncf %131 : vector<8x128xf32> to vector<8x128xbf16>
    %136 = arith.index_cast %101 : i32 to index
    %c0_50 = arith.constant 0 : index
    %137 = vector.load %arg16[%136, %c0_50] : memref<32x128xbf16, #tpu.memory_space<vmem>>, vector<8x128xbf16>
    tpu.vector_store %arg16[%136, %c0_50], %135 {strides = array<i32>} : memref<32x128xbf16, #tpu.memory_space<vmem>>, vector<8x128xbf16>,
    %c3_i32 = arith.constant 3 : i32
    %c0_51 = arith.constant 0 : index
    %c0_52 = arith.constant 0 : index
    %c0_53 = arith.constant 0 : index
    %138 = vector.load %arg13[%c0_51, %c0_52, %c0_53] : memref<2x8x128xf32, #tpu.memory_space<vmem>>, vector<1x8x128xf32>
    %139 = vector.shape_cast %138 : vector<1x8x128xf32> to vector<8x128xf32>
    %140 = arith.truncf %139 : vector<8x128xf32> to vector<8x128xbf16>
    %cst_54 = arith.constant dense<0.000000e+00> : vector<8x384xf32>
    %141 = tpu.matmul %140, %10, %cst_54 {dimension_numbers = #tpu.dot_dimension_numbers<[1], [0], [0], [1], [0, 0, 1, 1], [], []>} : vector<8x128xbf16>, vector<128x384xbf16>, vector<8x384xf32> -> vector<8x384xf32>
    %c8_i32_55 = arith.constant 8 : i32
    %142 = arith.muli %c3_i32, %c8_i32_55 : i32
    %143 = tpu.assume_multiple %142, 8 : i32
    %144 = arith.index_cast %143 : i32 to index
    %c0_56 = arith.constant 0 : index
    %145 = vector.load %arg15[%144, %c0_56] : memref<32x384xf32, #tpu.memory_space<vmem>>, vector<8x384xf32>
    %146 = vector.extract_strided_slice %145 {offsets = [0, 0], sizes = [8, 128], strides = [1, 1]} : vector<8x384xf32> to vector<8x128xf32>
    %147 = vector.extract_strided_slice %141 {offsets = [0, 0], sizes = [8, 128], strides = [1, 1]} : vector<8x384xf32> to vector<8x128xf32>
    %148 = arith.addf %146, %147 : vector<8x128xf32>
    %149 = arith.negf %148 : vector<8x128xf32>
    %150 = math.exp %149 : vector<8x128xf32>
    %cst_57 = arith.constant 1.000000e+00 : f32
    %151 = vector.broadcast %cst_57 : f32 to vector<8x128xf32>
    %152 = arith.addf %151, %150 : vector<8x128xf32>
    %153 = arith.divf %151, %152 : vector<8x128xf32>
    %154 = vector.extract_strided_slice %145 {offsets = [0, 128], sizes = [8, 128], strides = [1, 1]} : vector<8x384xf32> to vector<8x128xf32>
    %155 = vector.extract_strided_slice %141 {offsets = [0, 128], sizes = [8, 128], strides = [1, 1]} : vector<8x384xf32> to vector<8x128xf32>
    %156 = arith.addf %154, %155 : vector<8x128xf32>
    %157 = arith.negf %156 : vector<8x128xf32>
    %158 = math.exp %157 : vector<8x128xf32>
    %cst_58 = arith.constant 1.000000e+00 : f32
    %159 = vector.broadcast %cst_58 : f32 to vector<8x128xf32>
    %160 = arith.addf %159, %158 : vector<8x128xf32>
    %161 = arith.divf %159, %160 : vector<8x128xf32>
    %162 = vector.extract_strided_slice %145 {offsets = [0, 256], sizes = [8, 128], strides = [1, 1]} : vector<8x384xf32> to vector<8x128xf32>
    %163 = vector.extract_strided_slice %141 {offsets = [0, 256], sizes = [8, 128], strides = [1, 1]} : vector<8x384xf32> to vector<8x128xf32>
    %164 = vector.broadcast %11 : vector<1x128xf32> to vector<8x128xf32>
    %165 = arith.addf %163, %164 : vector<8x128xf32>
    %166 = arith.mulf %153, %165 : vector<8x128xf32>
    %167 = arith.addf %162, %166 : vector<8x128xf32>
    %168 = math.tanh %167 : vector<8x128xf32>
    %cst_59 = arith.constant 1.000000e+00 : f32
    %169 = vector.broadcast %cst_59 : f32 to vector<8x128xf32>
    %170 = arith.subf %169, %161 : vector<8x128xf32>
    %171 = arith.mulf %170, %168 : vector<8x128xf32>
    %172 = arith.mulf %161, %139 : vector<8x128xf32>
    %173 = arith.addf %171, %172 : vector<8x128xf32>
    %c0_60 = arith.constant 0 : index
    %c0_61 = arith.constant 0 : index
    %c0_62 = arith.constant 0 : index
    %174 = vector.load %arg13[%c0_60, %c0_61, %c0_62] : memref<2x8x128xf32, #tpu.memory_space<vmem>>, vector<1x8x128xf32>
    %175 = vector.shape_cast %174 : vector<1x8x128xf32> to vector<8x128xf32>
    %176 = vector.shape_cast %173 : vector<8x128xf32> to vector<1x8x128xf32>
    tpu.vector_store %arg13[%c0_60, %c0_61, %c0_62], %176 {strides = array<i32>} : memref<2x8x128xf32, #tpu.memory_space<vmem>>, vector<1x8x128xf32>,
    %177 = arith.truncf %173 : vector<8x128xf32> to vector<8x128xbf16>
    %178 = arith.index_cast %143 : i32 to index
    %c0_63 = arith.constant 0 : index
    %179 = vector.load %arg16[%178, %c0_63] : memref<32x128xbf16, #tpu.memory_space<vmem>>, vector<8x128xbf16>
    tpu.vector_store %arg16[%178, %c0_63], %177 {strides = array<i32>} : memref<32x128xbf16, #tpu.memory_space<vmem>>, vector<8x128xbf16>,
    %c4_i32 = arith.constant 4 : i32
    %c0_64 = arith.constant 0 : index
    %c0_65 = arith.constant 0 : index
    %180 = vector.load %arg16[%c0_64, %c0_65] : memref<32x128xbf16, #tpu.memory_space<vmem>>, vector<32x128xbf16>
    %c0_66 = arith.constant 0 : index
    %c0_67 = arith.constant 0 : index
    %181 = vector.load %arg6[%c0_66, %c0_67] : memref<128x384xbf16, #tpu.memory_space<vmem>>, vector<128x384xbf16>
    %cst_68 = arith.constant dense<0.000000e+00> : vector<32x384xf32>
    %182 = tpu.matmul %180, %181, %cst_68 {dimension_numbers = #tpu.dot_dimension_numbers<[1], [0], [0], [1], [0, 0, 1, 1], [], []>} : vector<32x128xbf16>, vector<128x384xbf16>, vector<32x384xf32> -> vector<32x384xf32>
    %c0_69 = arith.constant 0 : index
    %c0_70 = arith.constant 0 : index
    %183 = vector.load %arg8[%c0_69, %c0_70] : memref<1x384xf32, #tpu.memory_space<vmem>>, vector<1x384xf32>
    %184 = vector.broadcast %183 : vector<1x384xf32> to vector<32x384xf32>
    %185 = arith.addf %182, %184 : vector<32x384xf32>
    %c0_71 = arith.constant 0 : index
    %c0_72 = arith.constant 0 : index
    %186 = vector.load %arg15[%c0_71, %c0_72] : memref<32x384xf32, #tpu.memory_space<vmem>>, vector<32x384xf32>
    tpu.vector_store %arg15[%c0_71, %c0_72], %185 {strides = array<i32>} : memref<32x384xf32, #tpu.memory_space<vmem>>, vector<32x384xf32>,
    %c0_73 = arith.constant 0 : index
    %c0_74 = arith.constant 0 : index
    %187 = vector.load %arg7[%c0_73, %c0_74] : memref<128x384xbf16, #tpu.memory_space<vmem>>, vector<128x384xbf16>
    %c0_75 = arith.constant 0 : index
    %c0_76 = arith.constant 0 : index
    %188 = vector.load %arg9[%c0_75, %c0_76] : memref<1x128xf32, #tpu.memory_space<vmem>>, vector<1x128xf32>
    %c0_i32_77 = arith.constant 0 : i32
    %c1 = arith.constant 1 : index
    %c0_78 = arith.constant 0 : index
    %c0_79 = arith.constant 0 : index
    %189 = vector.load %arg13[%c1, %c0_78, %c0_79] : memref<2x8x128xf32, #tpu.memory_space<vmem>>, vector<1x8x128xf32>
    %190 = vector.shape_cast %189 : vector<1x8x128xf32> to vector<8x128xf32>
    %191 = arith.truncf %190 : vector<8x128xf32> to vector<8x128xbf16>
    %cst_80 = arith.constant dense<0.000000e+00> : vector<8x384xf32>
    %192 = tpu.matmul %191, %187, %cst_80 {dimension_numbers = #tpu.dot_dimension_numbers<[1], [0], [0], [1], [0, 0, 1, 1], [], []>} : vector<8x128xbf16>, vector<128x384xbf16>, vector<8x384xf32> -> vector<8x384xf32>
    %c8_i32_81 = arith.constant 8 : i32
    %193 = arith.muli %c0_i32_77, %c8_i32_81 : i32
    %194 = tpu.assume_multiple %193, 8 : i32
    %195 = arith.index_cast %194 : i32 to index
    %c0_82 = arith.constant 0 : index
    %196 = vector.load %arg15[%195, %c0_82] : memref<32x384xf32, #tpu.memory_space<vmem>>, vector<8x384xf32>
    %197 = vector.extract_strided_slice %196 {offsets = [0, 0], sizes = [8, 128], strides = [1, 1]} : vector<8x384xf32> to vector<8x128xf32>
    %198 = vector.extract_strided_slice %192 {offsets = [0, 0], sizes = [8, 128], strides = [1, 1]} : vector<8x384xf32> to vector<8x128xf32>
    %199 = arith.addf %197, %198 : vector<8x128xf32>
    %200 = arith.negf %199 : vector<8x128xf32>
    %201 = math.exp %200 : vector<8x128xf32>
    %cst_83 = arith.constant 1.000000e+00 : f32
    %202 = vector.broadcast %cst_83 : f32 to vector<8x128xf32>
    %203 = arith.addf %202, %201 : vector<8x128xf32>
    %204 = arith.divf %202, %203 : vector<8x128xf32>
    %205 = vector.extract_strided_slice %196 {offsets = [0, 128], sizes = [8, 128], strides = [1, 1]} : vector<8x384xf32> to vector<8x128xf32>
    %206 = vector.extract_strided_slice %192 {offsets = [0, 128], sizes = [8, 128], strides = [1, 1]} : vector<8x384xf32> to vector<8x128xf32>
    %207 = arith.addf %205, %206 : vector<8x128xf32>
    %208 = arith.negf %207 : vector<8x128xf32>
    %209 = math.exp %208 : vector<8x128xf32>
    %cst_84 = arith.constant 1.000000e+00 : f32
    %210 = vector.broadcast %cst_84 : f32 to vector<8x128xf32>
    %211 = arith.addf %210, %209 : vector<8x128xf32>
    %212 = arith.divf %210, %211 : vector<8x128xf32>
    %213 = vector.extract_strided_slice %196 {offsets = [0, 256], sizes = [8, 128], strides = [1, 1]} : vector<8x384xf32> to vector<8x128xf32>
    %214 = vector.extract_strided_slice %192 {offsets = [0, 256], sizes = [8, 128], strides = [1, 1]} : vector<8x384xf32> to vector<8x128xf32>
    %215 = vector.broadcast %188 : vector<1x128xf32> to vector<8x128xf32>
    %216 = arith.addf %214, %215 : vector<8x128xf32>
    %217 = arith.mulf %204, %216 : vector<8x128xf32>
    %218 = arith.addf %213, %217 : vector<8x128xf32>
    %219 = math.tanh %218 : vector<8x128xf32>
    %cst_85 = arith.constant 1.000000e+00 : f32
    %220 = vector.broadcast %cst_85 : f32 to vector<8x128xf32>
    %221 = arith.subf %220, %212 : vector<8x128xf32>
    %222 = arith.mulf %221, %219 : vector<8x128xf32>
    %223 = arith.mulf %212, %190 : vector<8x128xf32>
    %224 = arith.addf %222, %223 : vector<8x128xf32>
    %c1_86 = arith.constant 1 : index
    %c0_87 = arith.constant 0 : index
    %c0_88 = arith.constant 0 : index
    %225 = vector.load %arg13[%c1_86, %c0_87, %c0_88] : memref<2x8x128xf32, #tpu.memory_space<vmem>>, vector<1x8x128xf32>
    %226 = vector.shape_cast %225 : vector<1x8x128xf32> to vector<8x128xf32>
    %227 = vector.shape_cast %224 : vector<8x128xf32> to vector<1x8x128xf32>
    tpu.vector_store %arg13[%c1_86, %c0_87, %c0_88], %227 {strides = array<i32>} : memref<2x8x128xf32, #tpu.memory_space<vmem>>, vector<1x8x128xf32>,
    %c0_89 = arith.constant 0 : index
    %c0_90 = arith.constant 0 : index
    %228 = vector.load %arg14[%c0_89, %c0_90] : memref<8x128xf32, #tpu.memory_space<vmem>>, vector<8x128xf32>
    %229 = math.tanh %224 : vector<8x128xf32>
    %230 = arith.maximumf %228, %229 : vector<8x128xf32>
    %c0_91 = arith.constant 0 : index
    %c0_92 = arith.constant 0 : index
    %231 = vector.load %arg14[%c0_91, %c0_92] : memref<8x128xf32, #tpu.memory_space<vmem>>, vector<8x128xf32>
    tpu.vector_store %arg14[%c0_91, %c0_92], %230 {strides = array<i32>} : memref<8x128xf32, #tpu.memory_space<vmem>>, vector<8x128xf32>,
    %c1_i32_93 = arith.constant 1 : i32
    %c1_94 = arith.constant 1 : index
    %c0_95 = arith.constant 0 : index
    %c0_96 = arith.constant 0 : index
    %232 = vector.load %arg13[%c1_94, %c0_95, %c0_96] : memref<2x8x128xf32, #tpu.memory_space<vmem>>, vector<1x8x128xf32>
    %233 = vector.shape_cast %232 : vector<1x8x128xf32> to vector<8x128xf32>
    %234 = arith.truncf %233 : vector<8x128xf32> to vector<8x128xbf16>
    %cst_97 = arith.constant dense<0.000000e+00> : vector<8x384xf32>
    %235 = tpu.matmul %234, %187, %cst_97 {dimension_numbers = #tpu.dot_dimension_numbers<[1], [0], [0], [1], [0, 0, 1, 1], [], []>} : vector<8x128xbf16>, vector<128x384xbf16>, vector<8x384xf32> -> vector<8x384xf32>
    %c8_i32_98 = arith.constant 8 : i32
    %236 = arith.muli %c1_i32_93, %c8_i32_98 : i32
    %237 = tpu.assume_multiple %236, 8 : i32
    %238 = arith.index_cast %237 : i32 to index
    %c0_99 = arith.constant 0 : index
    %239 = vector.load %arg15[%238, %c0_99] : memref<32x384xf32, #tpu.memory_space<vmem>>, vector<8x384xf32>
    %240 = vector.extract_strided_slice %239 {offsets = [0, 0], sizes = [8, 128], strides = [1, 1]} : vector<8x384xf32> to vector<8x128xf32>
    %241 = vector.extract_strided_slice %235 {offsets = [0, 0], sizes = [8, 128], strides = [1, 1]} : vector<8x384xf32> to vector<8x128xf32>
    %242 = arith.addf %240, %241 : vector<8x128xf32>
    %243 = arith.negf %242 : vector<8x128xf32>
    %244 = math.exp %243 : vector<8x128xf32>
    %cst_100 = arith.constant 1.000000e+00 : f32
    %245 = vector.broadcast %cst_100 : f32 to vector<8x128xf32>
    %246 = arith.addf %245, %244 : vector<8x128xf32>
    %247 = arith.divf %245, %246 : vector<8x128xf32>
    %248 = vector.extract_strided_slice %239 {offsets = [0, 128], sizes = [8, 128], strides = [1, 1]} : vector<8x384xf32> to vector<8x128xf32>
    %249 = vector.extract_strided_slice %235 {offsets = [0, 128], sizes = [8, 128], strides = [1, 1]} : vector<8x384xf32> to vector<8x128xf32>
    %250 = arith.addf %248, %249 : vector<8x128xf32>
    %251 = arith.negf %250 : vector<8x128xf32>
    %252 = math.exp %251 : vector<8x128xf32>
    %cst_101 = arith.constant 1.000000e+00 : f32
    %253 = vector.broadcast %cst_101 : f32 to vector<8x128xf32>
    %254 = arith.addf %253, %252 : vector<8x128xf32>
    %255 = arith.divf %253, %254 : vector<8x128xf32>
    %256 = vector.extract_strided_slice %239 {offsets = [0, 256], sizes = [8, 128], strides = [1, 1]} : vector<8x384xf32> to vector<8x128xf32>
    %257 = vector.extract_strided_slice %235 {offsets = [0, 256], sizes = [8, 128], strides = [1, 1]} : vector<8x384xf32> to vector<8x128xf32>
    %258 = vector.broadcast %188 : vector<1x128xf32> to vector<8x128xf32>
    %259 = arith.addf %257, %258 : vector<8x128xf32>
    %260 = arith.mulf %247, %259 : vector<8x128xf32>
    %261 = arith.addf %256, %260 : vector<8x128xf32>
    %262 = math.tanh %261 : vector<8x128xf32>
    %cst_102 = arith.constant 1.000000e+00 : f32
    %263 = vector.broadcast %cst_102 : f32 to vector<8x128xf32>
    %264 = arith.subf %263, %255 : vector<8x128xf32>
    %265 = arith.mulf %264, %262 : vector<8x128xf32>
    %266 = arith.mulf %255, %233 : vector<8x128xf32>
    %267 = arith.addf %265, %266 : vector<8x128xf32>
    %c1_103 = arith.constant 1 : index
    %c0_104 = arith.constant 0 : index
    %c0_105 = arith.constant 0 : index
    %268 = vector.load %arg13[%c1_103, %c0_104, %c0_105] : memref<2x8x128xf32, #tpu.memory_space<vmem>>, vector<1x8x128xf32>
    %269 = vector.shape_cast %268 : vector<1x8x128xf32> to vector<8x128xf32>
    %270 = vector.shape_cast %267 : vector<8x128xf32> to vector<1x8x128xf32>
    tpu.vector_store %arg13[%c1_103, %c0_104, %c0_105], %270 {strides = array<i32>} : memref<2x8x128xf32, #tpu.memory_space<vmem>>, vector<1x8x128xf32>,
    %c0_106 = arith.constant 0 : index
    %c0_107 = arith.constant 0 : index
    %271 = vector.load %arg14[%c0_106, %c0_107] : memref<8x128xf32, #tpu.memory_space<vmem>>, vector<8x128xf32>
    %272 = math.tanh %267 : vector<8x128xf32>
    %273 = arith.maximumf %271, %272 : vector<8x128xf32>
    %c0_108 = arith.constant 0 : index
    %c0_109 = arith.constant 0 : index
    %274 = vector.load %arg14[%c0_108, %c0_109] : memref<8x128xf32, #tpu.memory_space<vmem>>, vector<8x128xf32>
    tpu.vector_store %arg14[%c0_108, %c0_109], %273 {strides = array<i32>} : memref<8x128xf32, #tpu.memory_space<vmem>>, vector<8x128xf32>,
    %c2_i32_110 = arith.constant 2 : i32
    %c1_111 = arith.constant 1 : index
    %c0_112 = arith.constant 0 : index
    %c0_113 = arith.constant 0 : index
    %275 = vector.load %arg13[%c1_111, %c0_112, %c0_113] : memref<2x8x128xf32, #tpu.memory_space<vmem>>, vector<1x8x128xf32>
    %276 = vector.shape_cast %275 : vector<1x8x128xf32> to vector<8x128xf32>
    %277 = arith.truncf %276 : vector<8x128xf32> to vector<8x128xbf16>
    %cst_114 = arith.constant dense<0.000000e+00> : vector<8x384xf32>
    %278 = tpu.matmul %277, %187, %cst_114 {dimension_numbers = #tpu.dot_dimension_numbers<[1], [0], [0], [1], [0, 0, 1, 1], [], []>} : vector<8x128xbf16>, vector<128x384xbf16>, vector<8x384xf32> -> vector<8x384xf32>
    %c8_i32_115 = arith.constant 8 : i32
    %279 = arith.muli %c2_i32_110, %c8_i32_115 : i32
    %280 = tpu.assume_multiple %279, 8 : i32
    %281 = arith.index_cast %280 : i32 to index
    %c0_116 = arith.constant 0 : index
    %282 = vector.load %arg15[%281, %c0_116] : memref<32x384xf32, #tpu.memory_space<vmem>>, vector<8x384xf32>
    %283 = vector.extract_strided_slice %282 {offsets = [0, 0], sizes = [8, 128], strides = [1, 1]} : vector<8x384xf32> to vector<8x128xf32>
    %284 = vector.extract_strided_slice %278 {offsets = [0, 0], sizes = [8, 128], strides = [1, 1]} : vector<8x384xf32> to vector<8x128xf32>
    %285 = arith.addf %283, %284 : vector<8x128xf32>
    %286 = arith.negf %285 : vector<8x128xf32>
    %287 = math.exp %286 : vector<8x128xf32>
    %cst_117 = arith.constant 1.000000e+00 : f32
    %288 = vector.broadcast %cst_117 : f32 to vector<8x128xf32>
    %289 = arith.addf %288, %287 : vector<8x128xf32>
    %290 = arith.divf %288, %289 : vector<8x128xf32>
    %291 = vector.extract_strided_slice %282 {offsets = [0, 128], sizes = [8, 128], strides = [1, 1]} : vector<8x384xf32> to vector<8x128xf32>
    %292 = vector.extract_strided_slice %278 {offsets = [0, 128], sizes = [8, 128], strides = [1, 1]} : vector<8x384xf32> to vector<8x128xf32>
    %293 = arith.addf %291, %292 : vector<8x128xf32>
    %294 = arith.negf %293 : vector<8x128xf32>
    %295 = math.exp %294 : vector<8x128xf32>
    %cst_118 = arith.constant 1.000000e+00 : f32
    %296 = vector.broadcast %cst_118 : f32 to vector<8x128xf32>
    %297 = arith.addf %296, %295 : vector<8x128xf32>
    %298 = arith.divf %296, %297 : vector<8x128xf32>
    %299 = vector.extract_strided_slice %282 {offsets = [0, 256], sizes = [8, 128], strides = [1, 1]} : vector<8x384xf32> to vector<8x128xf32>
    %300 = vector.extract_strided_slice %278 {offsets = [0, 256], sizes = [8, 128], strides = [1, 1]} : vector<8x384xf32> to vector<8x128xf32>
    %301 = vector.broadcast %188 : vector<1x128xf32> to vector<8x128xf32>
    %302 = arith.addf %300, %301 : vector<8x128xf32>
    %303 = arith.mulf %290, %302 : vector<8x128xf32>
    %304 = arith.addf %299, %303 : vector<8x128xf32>
    %305 = math.tanh %304 : vector<8x128xf32>
    %cst_119 = arith.constant 1.000000e+00 : f32
    %306 = vector.broadcast %cst_119 : f32 to vector<8x128xf32>
    %307 = arith.subf %306, %298 : vector<8x128xf32>
    %308 = arith.mulf %307, %305 : vector<8x128xf32>
    %309 = arith.mulf %298, %276 : vector<8x128xf32>
    %310 = arith.addf %308, %309 : vector<8x128xf32>
    %c1_120 = arith.constant 1 : index
    %c0_121 = arith.constant 0 : index
    %c0_122 = arith.constant 0 : index
    %311 = vector.load %arg13[%c1_120, %c0_121, %c0_122] : memref<2x8x128xf32, #tpu.memory_space<vmem>>, vector<1x8x128xf32>
    %312 = vector.shape_cast %311 : vector<1x8x128xf32> to vector<8x128xf32>
    %313 = vector.shape_cast %310 : vector<8x128xf32> to vector<1x8x128xf32>
    tpu.vector_store %arg13[%c1_120, %c0_121, %c0_122], %313 {strides = array<i32>} : memref<2x8x128xf32, #tpu.memory_space<vmem>>, vector<1x8x128xf32>,
    %c0_123 = arith.constant 0 : index
    %c0_124 = arith.constant 0 : index
    %314 = vector.load %arg14[%c0_123, %c0_124] : memref<8x128xf32, #tpu.memory_space<vmem>>, vector<8x128xf32>
    %315 = math.tanh %310 : vector<8x128xf32>
    %316 = arith.maximumf %314, %315 : vector<8x128xf32>
    %c0_125 = arith.constant 0 : index
    %c0_126 = arith.constant 0 : index
    %317 = vector.load %arg14[%c0_125, %c0_126] : memref<8x128xf32, #tpu.memory_space<vmem>>, vector<8x128xf32>
    tpu.vector_store %arg14[%c0_125, %c0_126], %316 {strides = array<i32>} : memref<8x128xf32, #tpu.memory_space<vmem>>, vector<8x128xf32>,
    %c3_i32_127 = arith.constant 3 : i32
    %c1_128 = arith.constant 1 : index
    %c0_129 = arith.constant 0 : index
    %c0_130 = arith.constant 0 : index
    %318 = vector.load %arg13[%c1_128, %c0_129, %c0_130] : memref<2x8x128xf32, #tpu.memory_space<vmem>>, vector<1x8x128xf32>
    %319 = vector.shape_cast %318 : vector<1x8x128xf32> to vector<8x128xf32>
    %320 = arith.truncf %319 : vector<8x128xf32> to vector<8x128xbf16>
    %cst_131 = arith.constant dense<0.000000e+00> : vector<8x384xf32>
    %321 = tpu.matmul %320, %187, %cst_131 {dimension_numbers = #tpu.dot_dimension_numbers<[1], [0], [0], [1], [0, 0, 1, 1], [], []>} : vector<8x128xbf16>, vector<128x384xbf16>, vector<8x384xf32> -> vector<8x384xf32>
    %c8_i32_132 = arith.constant 8 : i32
    %322 = arith.muli %c3_i32_127, %c8_i32_132 : i32
    %323 = tpu.assume_multiple %322, 8 : i32
    %324 = arith.index_cast %323 : i32 to index
    %c0_133 = arith.constant 0 : index
    %325 = vector.load %arg15[%324, %c0_133] : memref<32x384xf32, #tpu.memory_space<vmem>>, vector<8x384xf32>
    %326 = vector.extract_strided_slice %325 {offsets = [0, 0], sizes = [8, 128], strides = [1, 1]} : vector<8x384xf32> to vector<8x128xf32>
    %327 = vector.extract_strided_slice %321 {offsets = [0, 0], sizes = [8, 128], strides = [1, 1]} : vector<8x384xf32> to vector<8x128xf32>
    %328 = arith.addf %326, %327 : vector<8x128xf32>
    %329 = arith.negf %328 : vector<8x128xf32>
    %330 = math.exp %329 : vector<8x128xf32>
    %cst_134 = arith.constant 1.000000e+00 : f32
    %331 = vector.broadcast %cst_134 : f32 to vector<8x128xf32>
    %332 = arith.addf %331, %330 : vector<8x128xf32>
    %333 = arith.divf %331, %332 : vector<8x128xf32>
    %334 = vector.extract_strided_slice %325 {offsets = [0, 128], sizes = [8, 128], strides = [1, 1]} : vector<8x384xf32> to vector<8x128xf32>
    %335 = vector.extract_strided_slice %321 {offsets = [0, 128], sizes = [8, 128], strides = [1, 1]} : vector<8x384xf32> to vector<8x128xf32>
    %336 = arith.addf %334, %335 : vector<8x128xf32>
    %337 = arith.negf %336 : vector<8x128xf32>
    %338 = math.exp %337 : vector<8x128xf32>
    %cst_135 = arith.constant 1.000000e+00 : f32
    %339 = vector.broadcast %cst_135 : f32 to vector<8x128xf32>
    %340 = arith.addf %339, %338 : vector<8x128xf32>
    %341 = arith.divf %339, %340 : vector<8x128xf32>
    %342 = vector.extract_strided_slice %325 {offsets = [0, 256], sizes = [8, 128], strides = [1, 1]} : vector<8x384xf32> to vector<8x128xf32>
    %343 = vector.extract_strided_slice %321 {offsets = [0, 256], sizes = [8, 128], strides = [1, 1]} : vector<8x384xf32> to vector<8x128xf32>
    %344 = vector.broadcast %188 : vector<1x128xf32> to vector<8x128xf32>
    %345 = arith.addf %343, %344 : vector<8x128xf32>
    %346 = arith.mulf %333, %345 : vector<8x128xf32>
    %347 = arith.addf %342, %346 : vector<8x128xf32>
    %348 = math.tanh %347 : vector<8x128xf32>
    %cst_136 = arith.constant 1.000000e+00 : f32
    %349 = vector.broadcast %cst_136 : f32 to vector<8x128xf32>
    %350 = arith.subf %349, %341 : vector<8x128xf32>
    %351 = arith.mulf %350, %348 : vector<8x128xf32>
    %352 = arith.mulf %341, %319 : vector<8x128xf32>
    %353 = arith.addf %351, %352 : vector<8x128xf32>
    %c1_137 = arith.constant 1 : index
    %c0_138 = arith.constant 0 : index
    %c0_139 = arith.constant 0 : index
    %354 = vector.load %arg13[%c1_137, %c0_138, %c0_139] : memref<2x8x128xf32, #tpu.memory_space<vmem>>, vector<1x8x128xf32>
    %355 = vector.shape_cast %354 : vector<1x8x128xf32> to vector<8x128xf32>
    %356 = vector.shape_cast %353 : vector<8x128xf32> to vector<1x8x128xf32>
    tpu.vector_store %arg13[%c1_137, %c0_138, %c0_139], %356 {strides = array<i32>} : memref<2x8x128xf32, #tpu.memory_space<vmem>>, vector<1x8x128xf32>,
    %c0_140 = arith.constant 0 : index
    %c0_141 = arith.constant 0 : index
    %357 = vector.load %arg14[%c0_140, %c0_141] : memref<8x128xf32, #tpu.memory_space<vmem>>, vector<8x128xf32>
    %358 = math.tanh %353 : vector<8x128xf32>
    %359 = arith.maximumf %357, %358 : vector<8x128xf32>
    %c0_142 = arith.constant 0 : index
    %c0_143 = arith.constant 0 : index
    %360 = vector.load %arg14[%c0_142, %c0_143] : memref<8x128xf32, #tpu.memory_space<vmem>>, vector<8x128xf32>
    tpu.vector_store %arg14[%c0_142, %c0_143], %359 {strides = array<i32>} : memref<8x128xf32, #tpu.memory_space<vmem>>, vector<8x128xf32>,
    %c4_i32_144 = arith.constant 4 : i32
    %c1_i32_145 = arith.constant 1 : i32
    %361 = arith.cmpi eq, %arg0, %c1_i32_145 : i32
    %362 = arith.extui %361 : i1 to i32
    %c0_i32_146 = arith.constant 0 : i32
    %363 = arith.cmpi ne, %362, %c0_i32_146 : i32
    scf.if %363 {
      %c0_147 = arith.constant 0 : index
      %c0_148 = arith.constant 0 : index
      %364 = vector.load %arg14[%c0_147, %c0_148] : memref<8x128xf32, #tpu.memory_space<vmem>>, vector<8x128xf32>
      %365 = math.tanh %364 : vector<8x128xf32>
      %366 = arith.truncf %365 : vector<8x128xf32> to vector<8x128xbf16>
      %c0_149 = arith.constant 0 : index
      %c0_150 = arith.constant 0 : index
      %367 = vector.load %arg10[%c0_149, %c0_150] : memref<128x128xbf16, #tpu.memory_space<vmem>>, vector<128x128xbf16>
      %cst_151 = arith.constant dense<0.000000e+00> : vector<8x128xf32>
      %368 = tpu.matmul %366, %367, %cst_151 {dimension_numbers = #tpu.dot_dimension_numbers<[1], [0], [0], [1], [0, 0, 1, 1], [], []>} : vector<8x128xbf16>, vector<128x128xbf16>, vector<8x128xf32> -> vector<8x128xf32>
      %c0_152 = arith.constant 0 : index
      %c0_153 = arith.constant 0 : index
      %369 = vector.load %arg11[%c0_152, %c0_153] : memref<1x128xf32, #tpu.memory_space<vmem>>, vector<1x128xf32>
      %370 = vector.broadcast %369 : vector<1x128xf32> to vector<8x128xf32>
      %371 = arith.addf %368, %370 : vector<8x128xf32>
      %c0_154 = arith.constant 0 : index
      %c0_155 = arith.constant 0 : index
      %372 = vector.load %arg12[%c0_154, %c0_155] : memref<8x128xf32, #tpu.memory_space<vmem>>, vector<8x128xf32>
      tpu.vector_store %arg12[%c0_154, %c0_155], %371 {strides = array<i32>} : memref<8x128xf32, #tpu.memory_space<vmem>>, vector<8x128xf32>,
    } else {
    }
    return
  }
  func.func @transform_0(%arg0: i32) -> (i32, i32) {
    %c0_i32 = arith.constant 0 : i32
    %c0_i32_0 = arith.constant 0 : i32
    return %arg0, %c0_i32 : i32, i32
  }
  func.func @transform_1(%arg0: i32) -> (i32, i32) {
    %c0_i32 = arith.constant 0 : i32
    %c0_i32_0 = arith.constant 0 : i32
    %c0_i32_1 = arith.constant 0 : i32
    return %c0_i32, %c0_i32_0 : i32, i32
  }
  func.func @transform_2(%arg0: i32) -> (i32, i32) {
    %c0_i32 = arith.constant 0 : i32
    %c0_i32_0 = arith.constant 0 : i32
    %c0_i32_1 = arith.constant 0 : i32
    return %c0_i32, %c0_i32_0 : i32, i32
  }
  func.func @transform_3(%arg0: i32) -> (i32, i32) {
    %c0_i32 = arith.constant 0 : i32
    %c0_i32_0 = arith.constant 0 : i32
    %c0_i32_1 = arith.constant 0 : i32
    return %c0_i32, %c0_i32_0 : i32, i32
  }
  func.func @transform_4(%arg0: i32) -> (i32, i32) {
    %c0_i32 = arith.constant 0 : i32
    %c0_i32_0 = arith.constant 0 : i32
    %c0_i32_1 = arith.constant 0 : i32
    return %c0_i32, %c0_i32_0 : i32, i32
  }
  func.func @transform_5(%arg0: i32) -> (i32, i32) {
    %c0_i32 = arith.constant 0 : i32
    %c0_i32_0 = arith.constant 0 : i32
    %c0_i32_1 = arith.constant 0 : i32
    return %c0_i32, %c0_i32_0 : i32, i32
  }
  func.func @transform_6(%arg0: i32) -> (i32, i32) {
    %c0_i32 = arith.constant 0 : i32
    %c0_i32_0 = arith.constant 0 : i32
    %c0_i32_1 = arith.constant 0 : i32
    return %c0_i32, %c0_i32_0 : i32, i32
  }
  func.func @transform_7(%arg0: i32) -> (i32, i32) {
    %c0_i32 = arith.constant 0 : i32
    %c0_i32_0 = arith.constant 0 : i32
    %c0_i32_1 = arith.constant 0 : i32
    return %c0_i32, %c0_i32_0 : i32, i32
  }
  func.func @transform_8(%arg0: i32) -> (i32, i32) {
    %c0_i32 = arith.constant 0 : i32
    %c0_i32_0 = arith.constant 0 : i32
    %c0_i32_1 = arith.constant 0 : i32
    return %c0_i32, %c0_i32_0 : i32, i32
  }
  func.func @transform_9(%arg0: i32) -> (i32, i32) {
    %c0_i32 = arith.constant 0 : i32
    %c0_i32_0 = arith.constant 0 : i32
    %c0_i32_1 = arith.constant 0 : i32
    return %c0_i32, %c0_i32_0 : i32, i32
  }
  func.func @transform_10(%arg0: i32) -> (i32, i32) {
    %c0_i32 = arith.constant 0 : i32
    %c0_i32_0 = arith.constant 0 : i32
    %c0_i32_1 = arith.constant 0 : i32
    return %c0_i32, %c0_i32_0 : i32, i32
  }
  func.func @transform_11(%arg0: i32) -> (i32, i32) {
    %c0_i32 = arith.constant 0 : i32
    %c0_i32_0 = arith.constant 0 : i32
    %c0_i32_1 = arith.constant 0 : i32
    return %c0_i32, %c0_i32_0 : i32, i32
  }
}

</mosaic_0001>

<llo_original>
// kernel: gru_model_forward.1
$region0: #{gru_model_forward.1}
  #allocation0 [shape = 'u32[]', space=smem, size = 0x4, offset = 0x4, fixed_abs, tag = 'smem constant byte address 0x4 - core index']
  #allocation1 [shape = 'u32[72,128]{1,0:T(1,128)}', space=vmem, size = 0x9000, scoped, tag = 'internal scratch']
  #allocation2 [shape = 'f32[2,8,128]{2,1,0:T(8,128)}', space=vmem, size = 0x2000, scoped, tag = 'scratch operand']
  #allocation3 [shape = 'f32[8,128]{1,0:T(8,128)}', space=vmem, size = 0x1000, scoped, tag = 'scratch operand']
  #allocation4 [shape = 'f32[32,384]{1,0:T(8,128)}', space=vmem, size = 0xc000, scoped, tag = 'scratch operand']
  #allocation5 [shape = 'bf16[32,128]{1,0:T(8,128)(2,1)}', space=vmem, size = 0x2000, scoped, tag = 'scratch operand']
  %s0 = inlined_call_operand.vmem [shape: bf16[64,16], index: 0, kind: input, shape index: {}]
  %s1 = inlined_call_operand.vmem [shape: bf16[16,384], index: 1, kind: input, shape index: {}]
  %s2 = inlined_call_operand.vmem [shape: bf16[128,384], index: 2, kind: input, shape index: {}]
  %s3 = inlined_call_operand.vmem [shape: f32[1,384], index: 3, kind: input, shape index: {}]
  %s4 = inlined_call_operand.vmem [shape: f32[1,128], index: 4, kind: input, shape index: {}]
  %s5 = inlined_call_operand.vmem [shape: bf16[128,384], index: 5, kind: input, shape index: {}]
  %s6 = inlined_call_operand.vmem [shape: bf16[128,384], index: 6, kind: input, shape index: {}]
  %s7 = inlined_call_operand.vmem [shape: f32[1,384], index: 7, kind: input, shape index: {}]
  %s8 = inlined_call_operand.vmem [shape: f32[1,128], index: 8, kind: input, shape index: {}]
  %s9 = inlined_call_operand.vmem [shape: bf16[128,128], index: 9, kind: input, shape index: {}]
  %s10 = inlined_call_operand.vmem [shape: f32[1,128], index: 10, kind: input, shape index: {}]
  %s11 = inlined_call_operand.vmem [shape: f32[8,128], index: 11, kind: output, shape index: {}]
  %s12 = sld [smem:[#allocation0]]
  $region85: #{gru_model_forward.1} parent=0
    _
  %s14 = ssub.s32 1, %s12
  %s15 = scalar_select 0, %s14, %s12
  loop: start=0, step=1, limit=4
  $region2: #{gru_model_forward.1} parent=0 // loop_pre_header
    _
  $region3: #{gru_model_forward.1} parent=0 // loop_header
    %s17 = sphi 0, %s21
    %p18 = scmp.ge.s32.totalorder %s17, 4
    %s27 = sphi 0, %s29
    %s30 = sphi 0, %s27
    %s31 = sphi 0, %s30
    %s47 = sphi 0, %s31
    %s51 = sphi 0, %s51
    %s53 = sphi 0, %s51
    %s54 = sphi 0, %s53
    %s68 = sphi 0, %s54
    %s72 = sphi 0, %s72
    %s74 = sphi 0, %s72
    %s75 = sphi 0, %s74
    %s89 = sphi 0, %s75
    %s93 = sphi 0, %s93
    %s95 = sphi 0, %s93
    %s96 = sphi 0, %s95
    %s110 = sphi 0, %s96
    %s114 = sphi 0, %s114
    %s116 = sphi 0, %s114
    %s117 = sphi 0, %s116
    %s131 = sphi 0, %s117
    %s135 = sphi 0, %s135
    %s137 = sphi 0, %s135
    %s138 = sphi 0, %s137
    %s152 = sphi 0, %s138
    %s156 = sphi 0, %s156
    %s158 = sphi 0, %s156
    %s159 = sphi 0, %s158
    %s173 = sphi 0, %s159
    %s177 = sphi 0, %s177
    %s179 = sphi 0, %s177
    %s180 = sphi 0, %s179
    %s194 = sphi 0, %s180
    %s198 = sphi 0, %s198
    %s200 = sphi 0, %s198
    %s201 = sphi 0, %s200
    %s215 = sphi 0, %s201
    %s219 = sphi 0, %s219
    %s221 = sphi 0, %s219
    %s222 = sphi 0, %s221
    %s236 = sphi 0, %s222
    %s240 = sphi 0, %s240
    %s242 = sphi 0, %s240
    %s243 = sphi 0, %s242
    %s257 = sphi 0, %s243
    %s261 = sphi 0, %s261
    %s263 = sphi 0, %s261
    %s264 = sphi 0, %s263
    %s278 = sphi 0, %s264
  $region4: #{gru_model_forward.1} parent=0 // loop_header_branch
    %20 = sbr.rel (%p18) target = $region8
  $region5: #{gru_model_forward.1} parent=0 // loop_body
    %s22 = ssub.s32 %s17, 1
    %s23 = ssub.s32 %s17, 2
    %s24 = sadd.s32 %s17, 1
    %s25 = ssub.s32 %s17, %s24
    %p26 = scmp.eq.s32.totalorder %s25, 0
    %s28 = sadd.s32 %s27, 1
    %s29 = scalar_select %p26, %s27, %s28
    %p32 = pneg %p26
    %p33 = scmp.eq.s32.totalorder %s17, 1
    %p34 = por %p32, %p33
    %p35 = scmp.ne.s32.totalorder %s27, %s30
    %p36 = scmp.eq.s32.totalorder %s17, 0
    %p37 = por %p35, %p36
    %p38 = scmp.ne.s32.totalorder %s27, %s30
    %p39 = scmp.eq.s32.totalorder %s22, 1
    %p40 = por %p38, %p39
    %p41 = scmp.ne.s32.totalorder %s30, %s31
    %p42 = scmp.eq.s32.totalorder %s22, 0
    %p43 = por %p41, %p42
    %p44 = scmp.ne.s32.totalorder %s30, %s31
    %p45 = scmp.eq.s32.totalorder %s23, 1
    %p46 = por %p44, %p45
    %p48 = scmp.ne.s32.totalorder %s31, %s47
    %p49 = scmp.eq.s32.totalorder %s23, 0
    %p50 = por %p48, %p49
    %s52 = sadd.s32 %s51, 1
    %p55 = scmp.eq.s32.totalorder %s17, 1
    %p56 = scmp.ne.s32.totalorder %s51, %s53
    %p57 = scmp.eq.s32.totalorder %s17, 0
    %p58 = por %p56, %p57
    %p59 = scmp.ne.s32.totalorder %s51, %s53
    %p60 = scmp.eq.s32.totalorder %s22, 1
    %p61 = por %p59, %p60
    %p62 = scmp.ne.s32.totalorder %s53, %s54
    %p63 = scmp.eq.s32.totalorder %s22, 0
    %p64 = por %p62, %p63
    %p65 = scmp.ne.s32.totalorder %s53, %s54
    %p66 = scmp.eq.s32.totalorder %s23, 1
    %p67 = por %p65, %p66
    %p69 = scmp.ne.s32.totalorder %s54, %s68
    %p70 = scmp.eq.s32.totalorder %s23, 0
    %p71 = por %p69, %p70
    %s73 = sadd.s32 %s72, 1
    %p76 = scmp.eq.s32.totalorder %s17, 1
    %p77 = scmp.ne.s32.totalorder %s72, %s74
    %p78 = scmp.eq.s32.totalorder %s17, 0
    %p79 = por %p77, %p78
    %p80 = scmp.ne.s32.totalorder %s72, %s74
    %p81 = scmp.eq.s32.totalorder %s22, 1
    %p82 = por %p80, %p81
    %p83 = scmp.ne.s32.totalorder %s74, %s75
    %p84 = scmp.eq.s32.totalorder %s22, 0
    %p85 = por %p83, %p84
    %p86 = scmp.ne.s32.totalorder %s74, %s75
    %p87 = scmp.eq.s32.totalorder %s23, 1
    %p88 = por %p86, %p87
    %p90 = scmp.ne.s32.totalorder %s75, %s89
    %p91 = scmp.eq.s32.totalorder %s23, 0
    %p92 = por %p90, %p91
    %s94 = sadd.s32 %s93, 1
    %p97 = scmp.eq.s32.totalorder %s17, 1
    %p98 = scmp.ne.s32.totalorder %s93, %s95
    %p99 = scmp.eq.s32.totalorder %s17, 0
    %p100 = por %p98, %p99
    %p101 = scmp.ne.s32.totalorder %s93, %s95
    %p102 = scmp.eq.s32.totalorder %s22, 1
    %p103 = por %p101, %p102
    %p104 = scmp.ne.s32.totalorder %s95, %s96
    %p105 = scmp.eq.s32.totalorder %s22, 0
    %p106 = por %p104, %p105
    %p107 = scmp.ne.s32.totalorder %s95, %s96
    %p108 = scmp.eq.s32.totalorder %s23, 1
    %p109 = por %p107, %p108
    %p111 = scmp.ne.s32.totalorder %s96, %s110
    %p112 = scmp.eq.s32.totalorder %s23, 0
    %p113 = por %p111, %p112
    %s115 = sadd.s32 %s114, 1
    %p118 = scmp.eq.s32.totalorder %s17, 1
    %p119 = scmp.ne.s32.totalorder %s114, %s116
    %p120 = scmp.eq.s32.totalorder %s17, 0
    %p121 = por %p119, %p120
    %p122 = scmp.ne.s32.totalorder %s114, %s116
    %p123 = scmp.eq.s32.totalorder %s22, 1
    %p124 = por %p122, %p123
    %p125 = scmp.ne.s32.totalorder %s116, %s117
    %p126 = scmp.eq.s32.totalorder %s22, 0
    %p127 = por %p125, %p126
    %p128 = scmp.ne.s32.totalorder %s116, %s117
    %p129 = scmp.eq.s32.totalorder %s23, 1
    %p130 = por %p128, %p129
    %p132 = scmp.ne.s32.totalorder %s117, %s131
    %p133 = scmp.eq.s32.totalorder %s23, 0
    %p134 = por %p132, %p133
    %s136 = sadd.s32 %s135, 1
    %p139 = scmp.eq.s32.totalorder %s17, 1
    %p140 = scmp.ne.s32.totalorder %s135, %s137
    %p141 = scmp.eq.s32.totalorder %s17, 0
    %p142 = por %p140, %p141
    %p143 = scmp.ne.s32.totalorder %s135, %s137
    %p144 = scmp.eq.s32.totalorder %s22, 1
    %p145 = por %p143, %p144
    %p146 = scmp.ne.s32.totalorder %s137, %s138
    %p147 = scmp.eq.s32.totalorder %s22, 0
    %p148 = por %p146, %p147
    %p149 = scmp.ne.s32.totalorder %s137, %s138
    %p150 = scmp.eq.s32.totalorder %s23, 1
    %p151 = por %p149, %p150
    %p153 = scmp.ne.s32.totalorder %s138, %s152
    %p154 = scmp.eq.s32.totalorder %s23, 0
    %p155 = por %p153, %p154
    %s157 = sadd.s32 %s156, 1
    %p160 = scmp.eq.s32.totalorder %s17, 1
    %p161 = scmp.ne.s32.totalorder %s156, %s158
    %p162 = scmp.eq.s32.totalorder %s17, 0
    %p163 = por %p161, %p162
    %p164 = scmp.ne.s32.totalorder %s156, %s158
    %p165 = scmp.eq.s32.totalorder %s22, 1
    %p166 = por %p164, %p165
    %p167 = scmp.ne.s32.totalorder %s158, %s159
    %p168 = scmp.eq.s32.totalorder %s22, 0
    %p169 = por %p167, %p168
    %p170 = scmp.ne.s32.totalorder %s158, %s159
    %p171 = scmp.eq.s32.totalorder %s23, 1
    %p172 = por %p170, %p171
    %p174 = scmp.ne.s32.totalorder %s159, %s173
    %p175 = scmp.eq.s32.totalorder %s23, 0
    %p176 = por %p174, %p175
    %s178 = sadd.s32 %s177, 1
    %p181 = scmp.eq.s32.totalorder %s17, 1
    %p182 = scmp.ne.s32.totalorder %s177, %s179
    %p183 = scmp.eq.s32.totalorder %s17, 0
    %p184 = por %p182, %p183
    %p185 = scmp.ne.s32.totalorder %s177, %s179
    %p186 = scmp.eq.s32.totalorder %s22, 1
    %p187 = por %p185, %p186
    %p188 = scmp.ne.s32.totalorder %s179, %s180
    %p189 = scmp.eq.s32.totalorder %s22, 0
    %p190 = por %p188, %p189
    %p191 = scmp.ne.s32.totalorder %s179, %s180
    %p192 = scmp.eq.s32.totalorder %s23, 1
    %p193 = por %p191, %p192
    %p195 = scmp.ne.s32.totalorder %s180, %s194
    %p196 = scmp.eq.s32.totalorder %s23, 0
    %p197 = por %p195, %p196
    %s199 = sadd.s32 %s198, 1
    %p202 = scmp.eq.s32.totalorder %s17, 1
    %p203 = scmp.ne.s32.totalorder %s198, %s200
    %p204 = scmp.eq.s32.totalorder %s17, 0
    %p205 = por %p203, %p204
    %p206 = scmp.ne.s32.totalorder %s198, %s200
    %p207 = scmp.eq.s32.totalorder %s22, 1
    %p208 = por %p206, %p207
    %p209 = scmp.ne.s32.totalorder %s200, %s201
    %p210 = scmp.eq.s32.totalorder %s22, 0
    %p211 = por %p209, %p210
    %p212 = scmp.ne.s32.totalorder %s200, %s201
    %p213 = scmp.eq.s32.totalorder %s23, 1
    %p214 = por %p212, %p213
    %p216 = scmp.ne.s32.totalorder %s201, %s215
    %p217 = scmp.eq.s32.totalorder %s23, 0
    %p218 = por %p216, %p217
    %s220 = sadd.s32 %s219, 1
    %p223 = scmp.eq.s32.totalorder %s17, 1
    %p224 = scmp.ne.s32.totalorder %s219, %s221
    %p225 = scmp.eq.s32.totalorder %s17, 0
    %p226 = por %p224, %p225
    %p227 = scmp.ne.s32.totalorder %s219, %s221
    %p228 = scmp.eq.s32.totalorder %s22, 1
    %p229 = por %p227, %p228
    %p230 = scmp.ne.s32.totalorder %s221, %s222
    %p231 = scmp.eq.s32.totalorder %s22, 0
    %p232 = por %p230, %p231
    %p233 = scmp.ne.s32.totalorder %s221, %s222
    %p234 = scmp.eq.s32.totalorder %s23, 1
    %p235 = por %p233, %p234
    %p237 = scmp.ne.s32.totalorder %s222, %s236
    %p238 = scmp.eq.s32.totalorder %s23, 0
    %p239 = por %p237, %p238
    %s241 = sadd.s32 %s240, 1
    %p244 = scmp.eq.s32.totalorder %s17, 1
    %p245 = scmp.ne.s32.totalorder %s240, %s242
    %p246 = scmp.eq.s32.totalorder %s17, 0
    %p247 = por %p245, %p246
    %p248 = scmp.ne.s32.totalorder %s240, %s242
    %p249 = scmp.eq.s32.totalorder %s22, 1
    %p250 = por %p248, %p249
    %p251 = scmp.ne.s32.totalorder %s242, %s243
    %p252 = scmp.eq.s32.totalorder %s22, 0
    %p253 = por %p251, %p252
    %p254 = scmp.ne.s32.totalorder %s242, %s243
    %p255 = scmp.eq.s32.totalorder %s23, 1
    %p256 = por %p254, %p255
    %p258 = scmp.ne.s32.totalorder %s243, %s257
    %p259 = scmp.eq.s32.totalorder %s23, 0
    %p260 = por %p258, %p259
    %s262 = sadd.s32 %s261, 1
    %p265 = scmp.eq.s32.totalorder %s17, 1
    %p266 = scmp.ne.s32.totalorder %s261, %s263
    %p267 = scmp.eq.s32.totalorder %s17, 0
    %p268 = por %p266, %p267
    %p269 = scmp.ne.s32.totalorder %s261, %s263
    %p270 = scmp.eq.s32.totalorder %s22, 1
    %p271 = por %p269, %p270
    %p272 = scmp.ne.s32.totalorder %s263, %s264
    %p273 = scmp.eq.s32.totalorder %s22, 0
    %p274 = por %p272, %p273
    %p275 = scmp.ne.s32.totalorder %s263, %s264
    %p276 = scmp.eq.s32.totalorder %s23, 1
    %p277 = por %p275, %p276
    %p279 = scmp.ne.s32.totalorder %s264, %s278
    %p280 = scmp.eq.s32.totalorder %s23, 0
    %p281 = por %p279, %p280
    %p282 = scmp.le.s32.totalorder 1, %s17
    %p283 = scmp.lt.s32.totalorder %s17, 3
    %p284 = pnand %p282, %p283
    %p285 = pneg %p284
    // Predicated region
    $region9: #{gru_model_forward.1} parent=5 // pred_check
      _
    $region10: #{gru_model_forward.1} parent=5 // pred_check_branch
      %287 = sbr.rel (%p284) target = $region12
    $region11: #{gru_model_forward.1} parent=5 // pred_region
      %s288 = ssub.s32 %s17, 1
      // Predicated region
      $region13: #{gru_model_forward.1} parent=11 // pred_check
        %p289 = pneg %p64
      $region14: #{gru_model_forward.1} parent=11 // pred_check_branch
        %291 = sbr.rel (%p289) target = $region16
      $region15: #{gru_model_forward.1} parent=11 // pred_region
        _
      $region16: #{gru_model_forward.1} parent=11 // pred_fallthru
        _
      // Predicated region
      $region17: #{gru_model_forward.1} parent=11 // pred_check
        %p292 = pneg %p85
      $region18: #{gru_model_forward.1} parent=11 // pred_check_branch
        %294 = sbr.rel (%p292) target = $region20
      $region19: #{gru_model_forward.1} parent=11 // pred_region
        _
      $region20: #{gru_model_forward.1} parent=11 // pred_fallthru
        _
      // Predicated region
      $region21: #{gru_model_forward.1} parent=11 // pred_check
        %p295 = pneg %p106
      $region22: #{gru_model_forward.1} parent=11 // pred_check_branch
        %297 = sbr.rel (%p295) target = $region24
      $region23: #{gru_model_forward.1} parent=11 // pred_region
        _
      $region24: #{gru_model_forward.1} parent=11 // pred_fallthru
        _
      // Predicated region
      $region25: #{gru_model_forward.1} parent=11 // pred_check
        %p298 = pneg %p127
      $region26: #{gru_model_forward.1} parent=11 // pred_check_branch
        %300 = sbr.rel (%p298) target = $region28
      $region27: #{gru_model_forward.1} parent=11 // pred_region
        _
      $region28: #{gru_model_forward.1} parent=11 // pred_fallthru
        _
      // Predicated region
      $region29: #{gru_model_forward.1} parent=11 // pred_check
        %p301 = pneg %p148
      $region30: #{gru_model_forward.1} parent=11 // pred_check_branch
        %303 = sbr.rel (%p301) target = $region32
      $region31: #{gru_model_forward.1} parent=11 // pred_region
        _
      $region32: #{gru_model_forward.1} parent=11 // pred_fallthru
        _
      // Predicated region
      $region33: #{gru_model_forward.1} parent=11 // pred_check
        %p304 = pneg %p169
      $region34: #{gru_model_forward.1} parent=11 // pred_check_branch
        %306 = sbr.rel (%p304) target = $region36
      $region35: #{gru_model_forward.1} parent=11 // pred_region
        _
      $region36: #{gru_model_forward.1} parent=11 // pred_fallthru
        _
      // Predicated region
      $region37: #{gru_model_forward.1} parent=11 // pred_check
        %p307 = pneg %p190
      $region38: #{gru_model_forward.1} parent=11 // pred_check_branch
        %309 = sbr.rel (%p307) target = $region40
      $region39: #{gru_model_forward.1} parent=11 // pred_region
        _
      $region40: #{gru_model_forward.1} parent=11 // pred_fallthru
        _
      // Predicated region
      $region41: #{gru_model_forward.1} parent=11 // pred_check
        %p310 = pneg %p211
      $region42: #{gru_model_forward.1} parent=11 // pred_check_branch
        %312 = sbr.rel (%p310) target = $region44
      $region43: #{gru_model_forward.1} parent=11 // pred_region
        _
      $region44: #{gru_model_forward.1} parent=11 // pred_fallthru
        _
      // Predicated region
      $region45: #{gru_model_forward.1} parent=11 // pred_check
        %p313 = pneg %p232
      $region46: #{gru_model_forward.1} parent=11 // pred_check_branch
        %315 = sbr.rel (%p313) target = $region48
      $region47: #{gru_model_forward.1} parent=11 // pred_region
        _
      $region48: #{gru_model_forward.1} parent=11 // pred_fallthru
        _
      // Predicated region
      $region49: #{gru_model_forward.1} parent=11 // pred_check
        %p316 = pneg %p253
      $region50: #{gru_model_forward.1} parent=11 // pred_check_branch
        %318 = sbr.rel (%p316) target = $region52
      $region51: #{gru_model_forward.1} parent=11 // pred_region
        _
      $region52: #{gru_model_forward.1} parent=11 // pred_fallthru
        _
    $region12: #{gru_model_forward.1} parent=5 // pred_fallthru
      _
    %p319 = scmp.lt.s32.totalorder %s17, 2
    // Predicated region
    $region53: #{gru_model_forward.1} parent=5 // pred_check
      %p320 = pneg %p319
    $region54: #{gru_model_forward.1} parent=5 // pred_check_branch
      %322 = sbr.rel (%p320) target = $region56
    $region55: #{gru_model_forward.1} parent=5 // pred_region
      // Predicated region
      $region57: #{gru_model_forward.1} parent=55 // pred_check
        %p323 = pneg %p37
      $region58: #{gru_model_forward.1} parent=55 // pred_check_branch
        %325 = sbr.rel (%p323) target = $region60
      $region59: #{gru_model_forward.1} parent=55 // pred_region
        %s326 = smul.u32 4, %s17
        %p327 = scmp.lt.s32.totalorder %s326, 7
        %s328 = scalar_select %p327, %s326, 7
        %s329 = smul.addr %s328, 4
        %s330 = scalar_lea.vmem %s0, %s329
        %s331 = smul.u32 4, %s17
      $region60: #{gru_model_forward.1} parent=55 // pred_fallthru
        _
    $region56: #{gru_model_forward.1} parent=5 // pred_fallthru
      _
    %p332 = scmp.le.s32.totalorder 1, %s17
    %p333 = scmp.lt.s32.totalorder %s17, 3
    %p334 = pnand %p332, %p333
    %p335 = pneg %p334
    // Predicated region
    $region61: #{gru_model_forward.1} parent=5 // pred_check
      _
    $region62: #{gru_model_forward.1} parent=5 // pred_check_branch
      %337 = sbr.rel (%p334) target = $region64
    $region63: #{gru_model_forward.1} parent=5 // pred_region
      %s338 = ssub.s32 %s17, 1
      %s339 = smul.u32 4, %s22
      %p340 = scmp.lt.s32.totalorder %s339, 7
      %s341 = scalar_select %p340, %s339, 7
      %s342 = smul.addr %s341, 4
      %s343 = scalar_lea.vmem %s0, %s342
      %p344 = pneg %p43
      %p345 = pneg %p40
      %p346 = pneg %p64
      %p347 = pneg %p61
      %p348 = pneg %p85
      %p349 = pneg %p82
      %p350 = pneg %p106
      %p351 = pneg %p103
      %p352 = pneg %p127
      %p353 = pneg %p124
      %p354 = pneg %p148
      %p355 = pneg %p145
      %p356 = pneg %p169
      %p357 = pneg %p166
      %p358 = pneg %p190
      %p359 = pneg %p187
      %p360 = pneg %p211
      %p361 = pneg %p208
      %p362 = pneg %p232
      %p363 = pneg %p229
      %p364 = pneg %p253
      %p365 = pneg %p250
      %p366 = pneg %p274
      %p367 = pneg %p271
      %s368 = smul.u32 4, %s22
      %p369 = scmp.lt.s32.totalorder %s368, 7
      %s370 = scalar_select %p369, %s368, 7
      %s371 = smul.addr %s370, 4
      %s372 = scalar_lea.vmem %s0, %s371
      %s373 = smul.u32 4, %s22
      %p375 = scmp.eq.s32.totalorder %s22, 0
      // Predicated region
      $region65: #{gru_model_forward.1} parent=63 // pred_check
        %p376 = pneg %p375
      $region66: #{gru_model_forward.1} parent=63 // pred_check_branch
        %378 = sbr.rel (%p376) target = $region68
      $region67: #{gru_model_forward.1} parent=63 // pred_region
        %379 = vst [vmem:[#allocation2] sm:$0xff] 0.0
        %380 = vst [vmem:[#allocation2 + $0x8] sm:$0xff] 0.0
        %381 = vst [vmem:[#allocation3] sm:$0xff] -inf
      $region68: #{gru_model_forward.1} parent=63 // pred_fallthru
        _
      %v382 = vld [vmem:[%s372] sm:$0xf]
      %v383 = vld [vmem:[%s372 + $0x4] sm:$0xf]
      %v384 = vld [vmem:[%s372 + $0x8] sm:$0xf]
      %v385 = vld [vmem:[%s372 + $0xc] sm:$0xf]
      %v386 = vld [vmem:[%s1] sm:$0xff]
      %v387 = vld [vmem:[%s1 + $0x8] sm:$0xf]
      %v388 = vld [vmem:[%s1 + $0xc] sm:$0xff]
      %v389 = vld [vmem:[%s1 + $0x14] sm:$0xf]
      %v390 = vld [vmem:[%s3] sm:$0x7]
      %v392 = vperm.slane %v390, 0
      %v393 = vperm.slane %v390, 1
      %v394 = vperm.slane %v390, 2
      %v402 = vunpack.c.l.b16 %v382
      %v403 = vunpack.c.l.b16 %v383
      %v404 = vunpack.c.l.b16 %v384
      %v405 = vunpack.c.l.b16 %v385
      %v406 = vpack.c.b16 %v403, %v402
      %v407 = vpack.c.b16 %v405, %v404
      %v412 = vunpack.c.l.b16 %v386
      %v413 = vunpack.c.h.b16 %v386
      %v414 = vunpack.c.l.b16 %v387
      %v415 = vunpack.c.l.b16 %v388
      %v416 = vunpack.c.h.b16 %v388
      %v417 = vunpack.c.l.b16 %v389
      %v418 = vpack.c.b16 %v415, %v412
      %v419 = vpack.c.b16 %v416, %v413
      %v420 = vpack.c.b16 %v417, %v414
      %vm424 = vcmask 130048
      %v426 = vsel %vm424, %v406, 0
      %v429 = vsel %vm424, %v407, 0
      %431 = vmatpush.bf16.msra.mxu0 0
      %432 = vmatpush.bf16.msra.mxu0 0
      %433 = vmatpush.bf16.msra.mxu0 0
      %434 = vmatpush.bf16.msra.mxu0 0
      %435 = vmatpush.bf16.msra.mxu0 0
      %436 = vmatpush.bf16.msra.mxu0 0
      %437 = vmatpush.bf16.msra.mxu0 0
      %438 = vmatpush.bf16.msra.mxu0 %v418
      %439 = vmatmul.bf16.gmra.mxu0 %v426
      %v440 = vpop.f32.mrf.mxu0
      %v441 = vadd.f32 %v392, %v440
      %v442 = vpop.f32.mrf.mxu0
      %v443 = vadd.f32 %v392, %v442
      %444 = vmatmul.bf16.gmra.mxu0 %v429
      %v445 = vpop.f32.mrf.mxu0
      %v446 = vadd.f32 %v392, %v445
      %v447 = vpop.f32.mrf.mxu0
      %v448 = vadd.f32 %v392, %v447
      %449 = vdwg.mxu0
      %450 = vmatpush.bf16.msra.mxu0 0
      %451 = vmatpush.bf16.msra.mxu0 0
      %452 = vmatpush.bf16.msra.mxu0 0
      %453 = vmatpush.bf16.msra.mxu0 0
      %454 = vmatpush.bf16.msra.mxu0 0
      %455 = vmatpush.bf16.msra.mxu0 0
      %456 = vmatpush.bf16.msra.mxu0 0
      %457 = vmatpush.bf16.msra.mxu0 %v419
      %458 = vmatmul.bf16.gmra.mxu0 %v426
      %v459 = vpop.f32.mrf.mxu0
      %v460 = vadd.f32 %v393, %v459
      %v461 = vpop.f32.mrf.mxu0
      %v462 = vadd.f32 %v393, %v461
      %463 = vmatmul.bf16.gmra.mxu0 %v429
      %v464 = vpop.f32.mrf.mxu0
      %v465 = vadd.f32 %v393, %v464
      %v466 = vpop.f32.mrf.mxu0
      %v467 = vadd.f32 %v393, %v466
      %468 = vdwg.mxu0
      %469 = vmatpush.bf16.msra.mxu0 0
      %470 = vmatpush.bf16.msra.mxu0 0
      %471 = vmatpush.bf16.msra.mxu0 0
      %472 = vmatpush.bf16.msra.mxu0 0
      %473 = vmatpush.bf16.msra.mxu0 0
      %474 = vmatpush.bf16.msra.mxu0 0
      %475 = vmatpush.bf16.msra.mxu0 0
      %476 = vmatpush.bf16.msra.mxu0 %v420
      %477 = vmatmul.bf16.gmra.mxu0 %v426
      %v478 = vpop.f32.mrf.mxu0
      %v479 = vadd.f32 %v394, %v478
      %v480 = vpop.f32.mrf.mxu0
      %v481 = vadd.f32 %v394, %v480
      %482 = vmatmul.bf16.gmra.mxu0 %v429
      %v483 = vpop.f32.mrf.mxu0
      %v484 = vadd.f32 %v394, %v483
      %v485 = vpop.f32.mrf.mxu0
      %v486 = vadd.f32 %v394, %v485
      %487 = vdwg.mxu0
      %488 = vst [vmem:[#allocation4] sm:$0xff] %v441
      %489 = vst [vmem:[#allocation4 + $0x8] sm:$0xff] %v460
      %490 = vst [vmem:[#allocation4 + $0x10] sm:$0xff] %v479
      %491 = vst [vmem:[#allocation4 + $0x18] sm:$0xff] %v443
      %492 = vst [vmem:[#allocation4 + $0x20] sm:$0xff] %v462
      %493 = vst [vmem:[#allocation4 + $0x28] sm:$0xff] %v481
      %494 = vst [vmem:[#allocation4 + $0x30] sm:$0xff] %v446
      %495 = vst [vmem:[#allocation4 + $0x38] sm:$0xff] %v465
      %496 = vst [vmem:[#allocation4 + $0x40] sm:$0xff] %v484
      %497 = vst [vmem:[#allocation4 + $0x48] sm:$0xff] %v448
      %498 = vst [vmem:[#allocation4 + $0x50] sm:$0xff] %v467
      %499 = vst [vmem:[#allocation4 + $0x58] sm:$0xff] %v486
      %v500 = vld [vmem:[%s2] sm:$0xff]
      %v501 = vld [vmem:[%s2 + $0x8] sm:$0xf]
      %v502 = vld [vmem:[%s2 + $0xc] sm:$0xff]
      %v503 = vld [vmem:[%s2 + $0x14] sm:$0xf]
      %v504 = vld [vmem:[%s2 + $0x18] sm:$0xff]
      %v505 = vld [vmem:[%s2 + $0x20] sm:$0xf]
      %v506 = vld [vmem:[%s2 + $0x24] sm:$0xff]
      %v507 = vld [vmem:[%s2 + $0x2c] sm:$0xf]
      %v508 = vld [vmem:[%s2 + $0x30] sm:$0xff]
      %v509 = vld [vmem:[%s2 + $0x38] sm:$0xf]
      %v510 = vld [vmem:[%s2 + $0x3c] sm:$0xff]
      %v511 = vld [vmem:[%s2 + $0x44] sm:$0xf]
      %v512 = vld [vmem:[%s2 + $0x48] sm:$0xff]
      %v513 = vld [vmem:[%s2 + $0x50] sm:$0xf]
      %v514 = vld [vmem:[%s2 + $0x54] sm:$0xff]
      %v515 = vld [vmem:[%s2 + $0x5c] sm:$0xf]
      %v516 = vld [vmem:[%s2 + $0x60] sm:$0xff]
      %v517 = vld [vmem:[%s2 + $0x68] sm:$0xf]
      %v518 = vld [vmem:[%s2 + $0x6c] sm:$0xff]
      %v519 = vld [vmem:[%s2 + $0x74] sm:$0xf]
      %v520 = vld [vmem:[%s2 + $0x78] sm:$0xff]
      %v521 = vld [vmem:[%s2 + $0x80] sm:$0xf]
      %v522 = vld [vmem:[%s2 + $0x84] sm:$0xff]
      %v523 = vld [vmem:[%s2 + $0x8c] sm:$0xf]
      %v524 = vld [vmem:[%s2 + $0x90] sm:$0xff]
      %v525 = vld [vmem:[%s2 + $0x98] sm:$0xf]
      %v526 = vld [vmem:[%s2 + $0x9c] sm:$0xff]
      %v527 = vld [vmem:[%s2 + $0xa4] sm:$0xf]
      %v528 = vld [vmem:[%s2 + $0xa8] sm:$0xff]
      %v529 = vld [vmem:[%s2 + $0xb0] sm:$0xf]
      %v530 = vld [vmem:[%s2 + $0xb4] sm:$0xff]
      %v531 = vld [vmem:[%s2 + $0xbc] sm:$0xf]
      %v532 = vld [vmem:[%s4] sm:$0x1]
      %v533 = vld [vmem:[#allocation2] sm:$0xff]
      %v534 = vpack.c.bf16 %v533, %v533
      %v567 = vunpack.c.l.b16 %v500
      %v568 = vunpack.c.h.b16 %v500
      %v569 = vunpack.c.l.b16 %v501
      %v570 = vunpack.c.l.b16 %v502
      %v571 = vunpack.c.h.b16 %v502
      %v572 = vunpack.c.l.b16 %v503
      %v573 = vunpack.c.l.b16 %v504
      %v574 = vunpack.c.h.b16 %v504
      %v575 = vunpack.c.l.b16 %v505
      %v576 = vunpack.c.l.b16 %v506
      %v577 = vunpack.c.h.b16 %v506
      %v578 = vunpack.c.l.b16 %v507
      %v579 = vunpack.c.l.b16 %v508
      %v580 = vunpack.c.h.b16 %v508
      %v581 = vunpack.c.l.b16 %v509
      %v582 = vunpack.c.l.b16 %v510
      %v583 = vunpack.c.h.b16 %v510
      %v584 = vunpack.c.l.b16 %v511
      %v585 = vunpack.c.l.b16 %v512
      %v586 = vunpack.c.h.b16 %v512
      %v587 = vunpack.c.l.b16 %v513
      %v588 = vunpack.c.l.b16 %v514
      %v589 = vunpack.c.h.b16 %v514
      %v590 = vunpack.c.l.b16 %v515
      %v591 = vunpack.c.l.b16 %v516
      %v592 = vunpack.c.h.b16 %v516
      %v593 = vunpack.c.l.b16 %v517
      %v594 = vunpack.c.l.b16 %v518
      %v595 = vunpack.c.h.b16 %v518
      %v596 = vunpack.c.l.b16 %v519
      %v597 = vunpack.c.l.b16 %v520
      %v598 = vunpack.c.h.b16 %v520
      %v599 = vunpack.c.l.b16 %v521
      %v600 = vunpack.c.l.b16 %v522
      %v601 = vunpack.c.h.b16 %v522
      %v602 = vunpack.c.l.b16 %v523
      %v603 = vunpack.c.l.b16 %v524
      %v604 = vunpack.c.h.b16 %v524
      %v605 = vunpack.c.l.b16 %v525
      %v606 = vunpack.c.l.b16 %v526
      %v607 = vunpack.c.h.b16 %v526
      %v608 = vunpack.c.l.b16 %v527
      %v609 = vunpack.c.l.b16 %v528
      %v610 = vunpack.c.h.b16 %v528
      %v611 = vunpack.c.l.b16 %v529
      %v612 = vunpack.c.l.b16 %v530
      %v613 = vunpack.c.h.b16 %v530
      %v614 = vunpack.c.l.b16 %v531
      %v615 = vpack.c.b16 %v570, %v567
      %v616 = vpack.c.b16 %v571, %v568
      %v617 = vpack.c.b16 %v572, %v569
      %v618 = vpack.c.b16 %v576, %v573
      %v619 = vpack.c.b16 %v577, %v574
      %v620 = vpack.c.b16 %v578, %v575
      %v621 = vpack.c.b16 %v582, %v579
      %v622 = vpack.c.b16 %v583, %v580
      %v623 = vpack.c.b16 %v584, %v581
      %v624 = vpack.c.b16 %v588, %v585
      %v625 = vpack.c.b16 %v589, %v586
      %v626 = vpack.c.b16 %v590, %v587
      %v627 = vpack.c.b16 %v594, %v591
      %v628 = vpack.c.b16 %v595, %v592
      %v629 = vpack.c.b16 %v596, %v593
      %v630 = vpack.c.b16 %v600, %v597
      %v631 = vpack.c.b16 %v601, %v598
      %v632 = vpack.c.b16 %v602, %v599
      %v633 = vpack.c.b16 %v606, %v603
      %v634 = vpack.c.b16 %v607, %v604
      %v635 = vpack.c.b16 %v608, %v605
      %v636 = vpack.c.b16 %v612, %v609
      %v637 = vpack.c.b16 %v613, %v610
      %v638 = vpack.c.b16 %v614, %v611
      %663 = vmatpush.bf16.msra.mxu0 %v636
      %664 = vmatpush.bf16.msra.mxu0 %v633
      %665 = vmatpush.bf16.msra.mxu0 %v630
      %666 = vmatpush.bf16.msra.mxu0 %v627
      %667 = vmatpush.bf16.msra.mxu0 %v624
      %668 = vmatpush.bf16.msra.mxu0 %v621
      %669 = vmatpush.bf16.msra.mxu0 %v618
      %670 = vmatpush.bf16.msra.mxu0 %v615
      %671 = vmatmul.bf16.gmra.mxu0 %v534
      %v672 = vpop.f32.mrf.mxu0
      %v673 = vadd.f32 0.0, %v672
      %v674 = vpop.f32.mrf.mxu0
      %675 = vdwg.mxu0
      %676 = vmatpush.bf16.msra.mxu0 %v637
      %677 = vmatpush.bf16.msra.mxu0 %v634
      %678 = vmatpush.bf16.msra.mxu0 %v631
      %679 = vmatpush.bf16.msra.mxu0 %v628
      %680 = vmatpush.bf16.msra.mxu0 %v625
      %681 = vmatpush.bf16.msra.mxu0 %v622
      %682 = vmatpush.bf16.msra.mxu0 %v619
      %683 = vmatpush.bf16.msra.mxu0 %v616
      %684 = vmatmul.bf16.gmra.mxu0 %v534
      %v685 = vpop.f32.mrf.mxu0
      %v686 = vadd.f32 0.0, %v685
      %v687 = vpop.f32.mrf.mxu0
      %688 = vdwg.mxu0
      %689 = vmatpush.bf16.msra.mxu0 %v638
      %690 = vmatpush.bf16.msra.mxu0 %v635
      %691 = vmatpush.bf16.msra.mxu0 %v632
      %692 = vmatpush.bf16.msra.mxu0 %v629
      %693 = vmatpush.bf16.msra.mxu0 %v626
      %694 = vmatpush.bf16.msra.mxu0 %v623
      %695 = vmatpush.bf16.msra.mxu0 %v620
      %696 = vmatpush.bf16.msra.mxu0 %v617
      %697 = vmatmul.bf16.gmra.mxu0 %v534
      %v698 = vpop.f32.mrf.mxu0
      %v699 = vadd.f32 0.0, %v698
      %v700 = vpop.f32.mrf.mxu0
      %701 = vdwg.mxu0
      %s702 = smul.u32 0, 3
      %s703 = smul.addr %s702, 8
      %s704 = scalar_lea.vmem [#allocation4], %s703
      %v705 = vld [vmem:[%s704] sm:$0xff]
      %v706 = vld [vmem:[%s704 + $0x8] sm:$0xff]
      %v707 = vld [vmem:[%s704 + $0x10] sm:$0xff]
      %v708 = vadd.f32 %v705, %v673
      %v709 = vxor.u32 %v708, 2147483648
      %v710 = vmul.f32 %v709, 1.442695
      %v711 = vpow.pop %v710
      %v712 = vadd.f32 %v711, 1.0
      %v713 = vrcp.pop %v712
      %v714 = vmul.f32 %v712, %v713
      %v715 = vsub.f32 1.0, %v714
      %v716 = vmul.f32 %v713, %v715
      %v717 = vadd.f32 %v713, %v716
      %vm718 = vweird.f32 %v712
      %vm719 = vweird.f32 %v713
      %vm720 = vmor %vm718, %vm719
      %v721 = vsel %vm720, %v713, %v717
      %v722 = vand.u32 2147483647, %v712
      %vm723 = vcmp.eq.f32.partialorder %v722, 8.507059e+37
      %v724 = vand.u32 %v712, 2147483648
      %v725 = vor.u32 1.1754944e-38, %v724
      %v726 = vsel %vm723, %v725, %v721
      %v727 = vmul.f32 1.0, %v726
      %v728 = vadd.f32 %v706, %v686
      %v729 = vxor.u32 %v728, 2147483648
      %v730 = vmul.f32 %v729, 1.442695
      %v731 = vpow.pop %v730
      %v732 = vadd.f32 %v731, 1.0
      %v733 = vrcp.pop %v732
      %v734 = vmul.f32 %v732, %v733
      %v735 = vsub.f32 1.0, %v734
      %v736 = vmul.f32 %v733, %v735
      %v737 = vadd.f32 %v733, %v736
      %vm738 = vweird.f32 %v732
      %vm739 = vweird.f32 %v733
      %vm740 = vmor %vm738, %vm739
      %v741 = vsel %vm740, %v733, %v737
      %v742 = vand.u32 2147483647, %v732
      %vm743 = vcmp.eq.f32.partialorder %v742, 8.507059e+37
      %v744 = vand.u32 %v732, 2147483648
      %v745 = vor.u32 1.1754944e-38, %v744
      %v746 = vsel %vm743, %v745, %v741
      %v747 = vmul.f32 1.0, %v746
      %v749 = vperm.slane %v532, 0
      %v751 = vadd.f32 %v699, %v749
      %v752 = vmul.f32 %v727, %v751
      %v753 = vadd.f32 %v707, %v752
      %v754 = vtanh.pop %v753
      %v755 = vsub.f32 1.0, %v747
      %v756 = vmul.f32 %v755, %v754
      %v757 = vmul.f32 %v747, %v533
      %v758 = vadd.f32 %v756, %v757
      %759 = vst [vmem:[#allocation2] sm:$0xff] %v758
      %v760 = vpack.c.bf16 %v758, %v758
      %761 = vst [vmem:[#allocation5] sm:$0xf] %v760
      %v762 = vld [vmem:[#allocation2] sm:$0xff]
      %v763 = vpack.c.bf16 %v762, %v762
      %764 = vmatpush.bf16.msra.mxu0 %v636
      %765 = vmatpush.bf16.msra.mxu0 %v633
      %766 = vmatpush.bf16.msra.mxu0 %v630
      %767 = vmatpush.bf16.msra.mxu0 %v627
      %768 = vmatpush.bf16.msra.mxu0 %v624
      %769 = vmatpush.bf16.msra.mxu0 %v621
      %770 = vmatpush.bf16.msra.mxu0 %v618
      %771 = vmatpush.bf16.msra.mxu0 %v615
      %772 = vmatmul.bf16.gmra.mxu0 %v763
      %v773 = vpop.f32.mrf.mxu0
      %v774 = vadd.f32 0.0, %v773
      %v775 = vpop.f32.mrf.mxu0
      %776 = vdwg.mxu0
      %777 = vmatpush.bf16.msra.mxu0 %v637
      %778 = vmatpush.bf16.msra.mxu0 %v634
      %779 = vmatpush.bf16.msra.mxu0 %v631
      %780 = vmatpush.bf16.msra.mxu0 %v628
      %781 = vmatpush.bf16.msra.mxu0 %v625
      %782 = vmatpush.bf16.msra.mxu0 %v622
      %783 = vmatpush.bf16.msra.mxu0 %v619
      %784 = vmatpush.bf16.msra.mxu0 %v616
      %785 = vmatmul.bf16.gmra.mxu0 %v763
      %v786 = vpop.f32.mrf.mxu0
      %v787 = vadd.f32 0.0, %v786
      %v788 = vpop.f32.mrf.mxu0
      %789 = vdwg.mxu0
      %790 = vmatpush.bf16.msra.mxu0 %v638
      %791 = vmatpush.bf16.msra.mxu0 %v635
      %792 = vmatpush.bf16.msra.mxu0 %v632
      %793 = vmatpush.bf16.msra.mxu0 %v629
      %794 = vmatpush.bf16.msra.mxu0 %v626
      %795 = vmatpush.bf16.msra.mxu0 %v623
      %796 = vmatpush.bf16.msra.mxu0 %v620
      %797 = vmatpush.bf16.msra.mxu0 %v617
      %798 = vmatmul.bf16.gmra.mxu0 %v763
      %v799 = vpop.f32.mrf.mxu0
      %v800 = vadd.f32 0.0, %v799
      %v801 = vpop.f32.mrf.mxu0
      %802 = vdwg.mxu0
      %s803 = smul.u32 1, 3
      %s804 = smul.addr %s803, 8
      %s805 = scalar_lea.vmem [#allocation4], %s804
      %v806 = vld [vmem:[%s805] sm:$0xff]
      %v807 = vld [vmem:[%s805 + $0x8] sm:$0xff]
      %v808 = vld [vmem:[%s805 + $0x10] sm:$0xff]
      %v809 = vadd.f32 %v806, %v774
      %v810 = vxor.u32 %v809, 2147483648
      %v811 = vmul.f32 %v810, 1.442695
      %v812 = vpow.pop %v811
      %v813 = vadd.f32 %v812, 1.0
      %v814 = vrcp.pop %v813
      %v815 = vmul.f32 %v813, %v814
      %v816 = vsub.f32 1.0, %v815
      %v817 = vmul.f32 %v814, %v816
      %v818 = vadd.f32 %v814, %v817
      %vm819 = vweird.f32 %v813
      %vm820 = vweird.f32 %v814
      %vm821 = vmor %vm819, %vm820
      %v822 = vsel %vm821, %v814, %v818
      %v823 = vand.u32 2147483647, %v813
      %vm824 = vcmp.eq.f32.partialorder %v823, 8.507059e+37
      %v825 = vand.u32 %v813, 2147483648
      %v826 = vor.u32 1.1754944e-38, %v825
      %v827 = vsel %vm824, %v826, %v822
      %v828 = vmul.f32 1.0, %v827
      %v829 = vadd.f32 %v807, %v787
      %v830 = vxor.u32 %v829, 2147483648
      %v831 = vmul.f32 %v830, 1.442695
      %v832 = vpow.pop %v831
      %v833 = vadd.f32 %v832, 1.0
      %v834 = vrcp.pop %v833
      %v835 = vmul.f32 %v833, %v834
      %v836 = vsub.f32 1.0, %v835
      %v837 = vmul.f32 %v834, %v836
      %v838 = vadd.f32 %v834, %v837
      %vm839 = vweird.f32 %v833
      %vm840 = vweird.f32 %v834
      %vm841 = vmor %vm839, %vm840
      %v842 = vsel %vm841, %v834, %v838
      %v843 = vand.u32 2147483647, %v833
      %vm844 = vcmp.eq.f32.partialorder %v843, 8.507059e+37
      %v845 = vand.u32 %v833, 2147483648
      %v846 = vor.u32 1.1754944e-38, %v845
      %v847 = vsel %vm844, %v846, %v842
      %v848 = vmul.f32 1.0, %v847
      %v849 = vadd.f32 %v800, %v749
      %v850 = vmul.f32 %v828, %v849
      %v851 = vadd.f32 %v808, %v850
      %v852 = vtanh.pop %v851
      %v853 = vsub.f32 1.0, %v848
      %v854 = vmul.f32 %v853, %v852
      %v855 = vmul.f32 %v848, %v762
      %v856 = vadd.f32 %v854, %v855
      %857 = vst [vmem:[#allocation2] sm:$0xff] %v856
      %v858 = vpack.c.bf16 %v856, %v856
      %s859 = scalar_lea.vmem [#allocation5], 4
      %860 = vst [vmem:[%s859] sm:$0xf] %v858
      %v861 = vld [vmem:[#allocation2] sm:$0xff]
      %v862 = vpack.c.bf16 %v861, %v861
      %863 = vmatpush.bf16.msra.mxu0 %v636
      %864 = vmatpush.bf16.msra.mxu0 %v633
      %865 = vmatpush.bf16.msra.mxu0 %v630
      %866 = vmatpush.bf16.msra.mxu0 %v627
      %867 = vmatpush.bf16.msra.mxu0 %v624
      %868 = vmatpush.bf16.msra.mxu0 %v621
      %869 = vmatpush.bf16.msra.mxu0 %v618
      %870 = vmatpush.bf16.msra.mxu0 %v615
      %871 = vmatmul.bf16.gmra.mxu0 %v862
      %v872 = vpop.f32.mrf.mxu0
      %v873 = vadd.f32 0.0, %v872
      %v874 = vpop.f32.mrf.mxu0
      %875 = vdwg.mxu0
      %876 = vmatpush.bf16.msra.mxu0 %v637
      %877 = vmatpush.bf16.msra.mxu0 %v634
      %878 = vmatpush.bf16.msra.mxu0 %v631
      %879 = vmatpush.bf16.msra.mxu0 %v628
      %880 = vmatpush.bf16.msra.mxu0 %v625
      %881 = vmatpush.bf16.msra.mxu0 %v622
      %882 = vmatpush.bf16.msra.mxu0 %v619
      %883 = vmatpush.bf16.msra.mxu0 %v616
      %884 = vmatmul.bf16.gmra.mxu0 %v862
      %v885 = vpop.f32.mrf.mxu0
      %v886 = vadd.f32 0.0, %v885
      %v887 = vpop.f32.mrf.mxu0
      %888 = vdwg.mxu0
      %889 = vmatpush.bf16.msra.mxu0 %v638
      %890 = vmatpush.bf16.msra.mxu0 %v635
      %891 = vmatpush.bf16.msra.mxu0 %v632
      %892 = vmatpush.bf16.msra.mxu0 %v629
      %893 = vmatpush.bf16.msra.mxu0 %v626
      %894 = vmatpush.bf16.msra.mxu0 %v623
      %895 = vmatpush.bf16.msra.mxu0 %v620
      %896 = vmatpush.bf16.msra.mxu0 %v617
      %897 = vmatmul.bf16.gmra.mxu0 %v862
      %v898 = vpop.f32.mrf.mxu0
      %v899 = vadd.f32 0.0, %v898
      %v900 = vpop.f32.mrf.mxu0
      %901 = vdwg.mxu0
      %s902 = smul.u32 2, 3
      %s903 = smul.addr %s902, 8
      %s904 = scalar_lea.vmem [#allocation4], %s903
      %v905 = vld [vmem:[%s904] sm:$0xff]
      %v906 = vld [vmem:[%s904 + $0x8] sm:$0xff]
      %v907 = vld [vmem:[%s904 + $0x10] sm:$0xff]
      %v908 = vadd.f32 %v905, %v873
      %v909 = vxor.u32 %v908, 2147483648
      %v910 = vmul.f32 %v909, 1.442695
      %v911 = vpow.pop %v910
      %v912 = vadd.f32 %v911, 1.0
      %v913 = vrcp.pop %v912
      %v914 = vmul.f32 %v912, %v913
      %v915 = vsub.f32 1.0, %v914
      %v916 = vmul.f32 %v913, %v915
      %v917 = vadd.f32 %v913, %v916
      %vm918 = vweird.f32 %v912
      %vm919 = vweird.f32 %v913
      %vm920 = vmor %vm918, %vm919
      %v921 = vsel %vm920, %v913, %v917
      %v922 = vand.u32 2147483647, %v912
      %vm923 = vcmp.eq.f32.partialorder %v922, 8.507059e+37
      %v924 = vand.u32 %v912, 2147483648
      %v925 = vor.u32 1.1754944e-38, %v924
      %v926 = vsel %vm923, %v925, %v921
      %v927 = vmul.f32 1.0, %v926
      %v928 = vadd.f32 %v906, %v886
      %v929 = vxor.u32 %v928, 2147483648
      %v930 = vmul.f32 %v929, 1.442695
      %v931 = vpow.pop %v930
      %v932 = vadd.f32 %v931, 1.0
      %v933 = vrcp.pop %v932
      %v934 = vmul.f32 %v932, %v933
      %v935 = vsub.f32 1.0, %v934
      %v936 = vmul.f32 %v933, %v935
      %v937 = vadd.f32 %v933, %v936
      %vm938 = vweird.f32 %v932
      %vm939 = vweird.f32 %v933
      %vm940 = vmor %vm938, %vm939
      %v941 = vsel %vm940, %v933, %v937
      %v942 = vand.u32 2147483647, %v932
      %vm943 = vcmp.eq.f32.partialorder %v942, 8.507059e+37
      %v944 = vand.u32 %v932, 2147483648
      %v945 = vor.u32 1.1754944e-38, %v944
      %v946 = vsel %vm943, %v945, %v941
      %v947 = vmul.f32 1.0, %v946
      %v948 = vadd.f32 %v899, %v749
      %v949 = vmul.f32 %v927, %v948
      %v950 = vadd.f32 %v907, %v949
      %v951 = vtanh.pop %v950
      %v952 = vsub.f32 1.0, %v947
      %v953 = vmul.f32 %v952, %v951
      %v954 = vmul.f32 %v947, %v861
      %v955 = vadd.f32 %v953, %v954
      %956 = vst [vmem:[#allocation2] sm:$0xff] %v955
      %v957 = vpack.c.bf16 %v955, %v955
      %s958 = scalar_lea.vmem [#allocation5], 8
      %959 = vst [vmem:[%s958] sm:$0xf] %v957
      %v960 = vld [vmem:[#allocation2] sm:$0xff]
      %v961 = vpack.c.bf16 %v960, %v960
      %962 = vmatpush.bf16.msra.mxu0 %v636
      %963 = vmatpush.bf16.msra.mxu0 %v633
      %964 = vmatpush.bf16.msra.mxu0 %v630
      %965 = vmatpush.bf16.msra.mxu0 %v627
      %966 = vmatpush.bf16.msra.mxu0 %v624
      %967 = vmatpush.bf16.msra.mxu0 %v621
      %968 = vmatpush.bf16.msra.mxu0 %v618
      %969 = vmatpush.bf16.msra.mxu0 %v615
      %970 = vmatmul.bf16.gmra.mxu0 %v961
      %v971 = vpop.f32.mrf.mxu0
      %v972 = vadd.f32 0.0, %v971
      %v973 = vpop.f32.mrf.mxu0
      %974 = vdwg.mxu0
      %975 = vmatpush.bf16.msra.mxu0 %v637
      %976 = vmatpush.bf16.msra.mxu0 %v634
      %977 = vmatpush.bf16.msra.mxu0 %v631
      %978 = vmatpush.bf16.msra.mxu0 %v628
      %979 = vmatpush.bf16.msra.mxu0 %v625
      %980 = vmatpush.bf16.msra.mxu0 %v622
      %981 = vmatpush.bf16.msra.mxu0 %v619
      %982 = vmatpush.bf16.msra.mxu0 %v616
      %983 = vmatmul.bf16.gmra.mxu0 %v961
      %v984 = vpop.f32.mrf.mxu0
      %v985 = vadd.f32 0.0, %v984
      %v986 = vpop.f32.mrf.mxu0
      %987 = vdwg.mxu0
      %988 = vmatpush.bf16.msra.mxu0 %v638
      %989 = vmatpush.bf16.msra.mxu0 %v635
      %990 = vmatpush.bf16.msra.mxu0 %v632
      %991 = vmatpush.bf16.msra.mxu0 %v629
      %992 = vmatpush.bf16.msra.mxu0 %v626
      %993 = vmatpush.bf16.msra.mxu0 %v623
      %994 = vmatpush.bf16.msra.mxu0 %v620
      %995 = vmatpush.bf16.msra.mxu0 %v617
      %996 = vmatmul.bf16.gmra.mxu0 %v961
      %v997 = vpop.f32.mrf.mxu0
      %v998 = vadd.f32 0.0, %v997
      %v999 = vpop.f32.mrf.mxu0
      %1000 = vdwg.mxu0
      %s1001 = smul.u32 3, 3
      %s1002 = smul.addr %s1001, 8
      %s1003 = scalar_lea.vmem [#allocation4], %s1002
      %v1004 = vld [vmem:[%s1003] sm:$0xff]
      %v1005 = vld [vmem:[%s1003 + $0x8] sm:$0xff]
      %v1006 = vld [vmem:[%s1003 + $0x10] sm:$0xff]
      %v1007 = vadd.f32 %v1004, %v972
      %v1008 = vxor.u32 %v1007, 2147483648
      %v1009 = vmul.f32 %v1008, 1.442695
      %v1010 = vpow.pop %v1009
      %v1011 = vadd.f32 %v1010, 1.0
      %v1012 = vrcp.pop %v1011
      %v1013 = vmul.f32 %v1011, %v1012
      %v1014 = vsub.f32 1.0, %v1013
      %v1015 = vmul.f32 %v1012, %v1014
      %v1016 = vadd.f32 %v1012, %v1015
      %vm1017 = vweird.f32 %v1011
      %vm1018 = vweird.f32 %v1012
      %vm1019 = vmor %vm1017, %vm1018
      %v1020 = vsel %vm1019, %v1012, %v1016
      %v1021 = vand.u32 2147483647, %v1011
      %vm1022 = vcmp.eq.f32.partialorder %v1021, 8.507059e+37
      %v1023 = vand.u32 %v1011, 2147483648
      %v1024 = vor.u32 1.1754944e-38, %v1023
      %v1025 = vsel %vm1022, %v1024, %v1020
      %v1026 = vmul.f32 1.0, %v1025
      %v1027 = vadd.f32 %v1005, %v985
      %v1028 = vxor.u32 %v1027, 2147483648
      %v1029 = vmul.f32 %v1028, 1.442695
      %v1030 = vpow.pop %v1029
      %v1031 = vadd.f32 %v1030, 1.0
      %v1032 = vrcp.pop %v1031
      %v1033 = vmul.f32 %v1031, %v1032
      %v1034 = vsub.f32 1.0, %v1033
      %v1035 = vmul.f32 %v1032, %v1034
      %v1036 = vadd.f32 %v1032, %v1035
      %vm1037 = vweird.f32 %v1031
      %vm1038 = vweird.f32 %v1032
      %vm1039 = vmor %vm1037, %vm1038
      %v1040 = vsel %vm1039, %v1032, %v1036
      %v1041 = vand.u32 2147483647, %v1031
      %vm1042 = vcmp.eq.f32.partialorder %v1041, 8.507059e+37
      %v1043 = vand.u32 %v1031, 2147483648
      %v1044 = vor.u32 1.1754944e-38, %v1043
      %v1045 = vsel %vm1042, %v1044, %v1040
      %v1046 = vmul.f32 1.0, %v1045
      %v1047 = vadd.f32 %v998, %v749
      %v1048 = vmul.f32 %v1026, %v1047
      %v1049 = vadd.f32 %v1006, %v1048
      %v1050 = vtanh.pop %v1049
      %v1051 = vsub.f32 1.0, %v1046
      %v1052 = vmul.f32 %v1051, %v1050
      %v1053 = vmul.f32 %v1046, %v960
      %v1054 = vadd.f32 %v1052, %v1053
      %1055 = vst [vmem:[#allocation2] sm:$0xff] %v1054
      %v1056 = vpack.c.bf16 %v1054, %v1054
      %s1057 = scalar_lea.vmem [#allocation5], 12
      %1058 = vst [vmem:[%s1057] sm:$0xf] %v1056
      %v1059 = vld [vmem:[#allocation5] sm:$0xf]
      %v1060 = vld [vmem:[#allocation5 + $0x4] sm:$0xf]
      %v1061 = vld [vmem:[#allocation5 + $0x8] sm:$0xf]
      %v1062 = vld [vmem:[#allocation5 + $0xc] sm:$0xf]
      %v1063 = vld [vmem:[%s5] sm:$0xff]
      %v1064 = vld [vmem:[%s5 + $0x8] sm:$0xf]
      %v1065 = vld [vmem:[%s5 + $0xc] sm:$0xff]
      %v1066 = vld [vmem:[%s5 + $0x14] sm:$0xf]
      %v1067 = vld [vmem:[%s5 + $0x18] sm:$0xff]
      %v1068 = vld [vmem:[%s5 + $0x20] sm:$0xf]
      %v1069 = vld [vmem:[%s5 + $0x24] sm:$0xff]
      %v1070 = vld [vmem:[%s5 + $0x2c] sm:$0xf]
      %v1071 = vld [vmem:[%s5 + $0x30] sm:$0xff]
      %v1072 = vld [vmem:[%s5 + $0x38] sm:$0xf]
      %v1073 = vld [vmem:[%s5 + $0x3c] sm:$0xff]
      %v1074 = vld [vmem:[%s5 + $0x44] sm:$0xf]
      %v1075 = vld [vmem:[%s5 + $0x48] sm:$0xff]
      %v1076 = vld [vmem:[%s5 + $0x50] sm:$0xf]
      %v1077 = vld [vmem:[%s5 + $0x54] sm:$0xff]
      %v1078 = vld [vmem:[%s5 + $0x5c] sm:$0xf]
      %v1079 = vld [vmem:[%s5 + $0x60] sm:$0xff]
      %v1080 = vld [vmem:[%s5 + $0x68] sm:$0xf]
      %v1081 = vld [vmem:[%s5 + $0x6c] sm:$0xff]
      %v1082 = vld [vmem:[%s5 + $0x74] sm:$0xf]
      %v1083 = vld [vmem:[%s5 + $0x78] sm:$0xff]
      %v1084 = vld [vmem:[%s5 + $0x80] sm:$0xf]
      %v1085 = vld [vmem:[%s5 + $0x84] sm:$0xff]
      %v1086 = vld [vmem:[%s5 + $0x8c] sm:$0xf]
      %v1087 = vld [vmem:[%s5 + $0x90] sm:$0xff]
      %v1088 = vld [vmem:[%s5 + $0x98] sm:$0xf]
      %v1089 = vld [vmem:[%s5 + $0x9c] sm:$0xff]
      %v1090 = vld [vmem:[%s5 + $0xa4] sm:$0xf]
      %v1091 = vld [vmem:[%s5 + $0xa8] sm:$0xff]
      %v1092 = vld [vmem:[%s5 + $0xb0] sm:$0xf]
      %v1093 = vld [vmem:[%s5 + $0xb4] sm:$0xff]
      %v1094 = vld [vmem:[%s5 + $0xbc] sm:$0xf]
      %v1095 = vld [vmem:[%s7] sm:$0x7]
      %v1097 = vperm.slane %v1095, 0
      %v1098 = vperm.slane %v1095, 1
      %v1099 = vperm.slane %v1095, 2
      %v1107 = vunpack.c.l.b16 %v1059
      %v1108 = vunpack.c.l.b16 %v1060
      %v1109 = vunpack.c.l.b16 %v1061
      %v1110 = vunpack.c.l.b16 %v1062
      %v1111 = vpack.c.b16 %v1108, %v1107
      %v1112 = vpack.c.b16 %v1110, %v1109
      %v1147 = vunpack.c.l.b16 %v1063
      %v1148 = vunpack.c.h.b16 %v1063
      %v1149 = vunpack.c.l.b16 %v1064
      %v1150 = vunpack.c.l.b16 %v1065
      %v1151 = vunpack.c.h.b16 %v1065
      %v1152 = vunpack.c.l.b16 %v1066
      %v1153 = vunpack.c.l.b16 %v1067
      %v1154 = vunpack.c.h.b16 %v1067
      %v1155 = vunpack.c.l.b16 %v1068
      %v1156 = vunpack.c.l.b16 %v1069
      %v1157 = vunpack.c.h.b16 %v1069
      %v1158 = vunpack.c.l.b16 %v1070
      %v1159 = vunpack.c.l.b16 %v1071
      %v1160 = vunpack.c.h.b16 %v1071
      %v1161 = vunpack.c.l.b16 %v1072
      %v1162 = vunpack.c.l.b16 %v1073
      %v1163 = vunpack.c.h.b16 %v1073
      %v1164 = vunpack.c.l.b16 %v1074
      %v1165 = vunpack.c.l.b16 %v1075
      %v1166 = vunpack.c.h.b16 %v1075
      %v1167 = vunpack.c.l.b16 %v1076
      %v1168 = vunpack.c.l.b16 %v1077
      %v1169 = vunpack.c.h.b16 %v1077
      %v1170 = vunpack.c.l.b16 %v1078
      %v1171 = vunpack.c.l.b16 %v1079
      %v1172 = vunpack.c.h.b16 %v1079
      %v1173 = vunpack.c.l.b16 %v1080
      %v1174 = vunpack.c.l.b16 %v1081
      %v1175 = vunpack.c.h.b16 %v1081
      %v1176 = vunpack.c.l.b16 %v1082
      %v1177 = vunpack.c.l.b16 %v1083
      %v1178 = vunpack.c.h.b16 %v1083
      %v1179 = vunpack.c.l.b16 %v1084
      %v1180 = vunpack.c.l.b16 %v1085
      %v1181 = vunpack.c.h.b16 %v1085
      %v1182 = vunpack.c.l.b16 %v1086
      %v1183 = vunpack.c.l.b16 %v1087
      %v1184 = vunpack.c.h.b16 %v1087
      %v1185 = vunpack.c.l.b16 %v1088
      %v1186 = vunpack.c.l.b16 %v1089
      %v1187 = vunpack.c.h.b16 %v1089
      %v1188 = vunpack.c.l.b16 %v1090
      %v1189 = vunpack.c.l.b16 %v1091
      %v1190 = vunpack.c.h.b16 %v1091
      %v1191 = vunpack.c.l.b16 %v1092
      %v1192 = vunpack.c.l.b16 %v1093
      %v1193 = vunpack.c.h.b16 %v1093
      %v1194 = vunpack.c.l.b16 %v1094
      %v1195 = vpack.c.b16 %v1150, %v1147
      %v1196 = vpack.c.b16 %v1151, %v1148
      %v1197 = vpack.c.b16 %v1152, %v1149
      %v1198 = vpack.c.b16 %v1156, %v1153
      %v1199 = vpack.c.b16 %v1157, %v1154
      %v1200 = vpack.c.b16 %v1158, %v1155
      %v1201 = vpack.c.b16 %v1162, %v1159
      %v1202 = vpack.c.b16 %v1163, %v1160
      %v1203 = vpack.c.b16 %v1164, %v1161
      %v1204 = vpack.c.b16 %v1168, %v1165
      %v1205 = vpack.c.b16 %v1169, %v1166
      %v1206 = vpack.c.b16 %v1170, %v1167
      %v1207 = vpack.c.b16 %v1174, %v1171
      %v1208 = vpack.c.b16 %v1175, %v1172
      %v1209 = vpack.c.b16 %v1176, %v1173
      %v1210 = vpack.c.b16 %v1180, %v1177
      %v1211 = vpack.c.b16 %v1181, %v1178
      %v1212 = vpack.c.b16 %v1182, %v1179
      %v1213 = vpack.c.b16 %v1186, %v1183
      %v1214 = vpack.c.b16 %v1187, %v1184
      %v1215 = vpack.c.b16 %v1188, %v1185
      %v1216 = vpack.c.b16 %v1192, %v1189
      %v1217 = vpack.c.b16 %v1193, %v1190
      %v1218 = vpack.c.b16 %v1194, %v1191
      %1243 = vmatpush.bf16.msra.mxu0 %v1216
      %1244 = vmatpush.bf16.msra.mxu0 %v1213
      %1245 = vmatpush.bf16.msra.mxu0 %v1210
      %1246 = vmatpush.bf16.msra.mxu0 %v1207
      %1247 = vmatpush.bf16.msra.mxu0 %v1204
      %1248 = vmatpush.bf16.msra.mxu0 %v1201
      %1249 = vmatpush.bf16.msra.mxu0 %v1198
      %1250 = vmatpush.bf16.msra.mxu0 %v1195
      %1251 = vmatmul.bf16.gmra.mxu0 %v1111
      %v1252 = vpop.f32.mrf.mxu0
      %v1253 = vadd.f32 %v1097, %v1252
      %v1254 = vpop.f32.mrf.mxu0
      %v1255 = vadd.f32 %v1097, %v1254
      %1256 = vmatmul.bf16.gmra.mxu0 %v1112
      %v1257 = vpop.f32.mrf.mxu0
      %v1258 = vadd.f32 %v1097, %v1257
      %v1259 = vpop.f32.mrf.mxu0
      %v1260 = vadd.f32 %v1097, %v1259
      %1261 = vdwg.mxu0
      %1262 = vmatpush.bf16.msra.mxu0 %v1217
      %1263 = vmatpush.bf16.msra.mxu0 %v1214
      %1264 = vmatpush.bf16.msra.mxu0 %v1211
      %1265 = vmatpush.bf16.msra.mxu0 %v1208
      %1266 = vmatpush.bf16.msra.mxu0 %v1205
      %1267 = vmatpush.bf16.msra.mxu0 %v1202
      %1268 = vmatpush.bf16.msra.mxu0 %v1199
      %1269 = vmatpush.bf16.msra.mxu0 %v1196
      %1270 = vmatmul.bf16.gmra.mxu0 %v1111
      %v1271 = vpop.f32.mrf.mxu0
      %v1272 = vadd.f32 %v1098, %v1271
      %v1273 = vpop.f32.mrf.mxu0
      %v1274 = vadd.f32 %v1098, %v1273
      %1275 = vmatmul.bf16.gmra.mxu0 %v1112
      %v1276 = vpop.f32.mrf.mxu0
      %v1277 = vadd.f32 %v1098, %v1276
      %v1278 = vpop.f32.mrf.mxu0
      %v1279 = vadd.f32 %v1098, %v1278
      %1280 = vdwg.mxu0
      %1281 = vmatpush.bf16.msra.mxu0 %v1218
      %1282 = vmatpush.bf16.msra.mxu0 %v1215
      %1283 = vmatpush.bf16.msra.mxu0 %v1212
      %1284 = vmatpush.bf16.msra.mxu0 %v1209
      %1285 = vmatpush.bf16.msra.mxu0 %v1206
      %1286 = vmatpush.bf16.msra.mxu0 %v1203
      %1287 = vmatpush.bf16.msra.mxu0 %v1200
      %1288 = vmatpush.bf16.msra.mxu0 %v1197
      %1289 = vmatmul.bf16.gmra.mxu0 %v1111
      %v1290 = vpop.f32.mrf.mxu0
      %v1291 = vadd.f32 %v1099, %v1290
      %v1292 = vpop.f32.mrf.mxu0
      %v1293 = vadd.f32 %v1099, %v1292
      %1294 = vmatmul.bf16.gmra.mxu0 %v1112
      %v1295 = vpop.f32.mrf.mxu0
      %v1296 = vadd.f32 %v1099, %v1295
      %v1297 = vpop.f32.mrf.mxu0
      %v1298 = vadd.f32 %v1099, %v1297
      %1299 = vdwg.mxu0
      %1300 = vst [vmem:[#allocation4] sm:$0xff] %v1253
      %1301 = vst [vmem:[#allocation4 + $0x8] sm:$0xff] %v1272
      %1302 = vst [vmem:[#allocation4 + $0x10] sm:$0xff] %v1291
      %1303 = vst [vmem:[#allocation4 + $0x18] sm:$0xff] %v1255
      %1304 = vst [vmem:[#allocation4 + $0x20] sm:$0xff] %v1274
      %1305 = vst [vmem:[#allocation4 + $0x28] sm:$0xff] %v1293
      %1306 = vst [vmem:[#allocation4 + $0x30] sm:$0xff] %v1258
      %1307 = vst [vmem:[#allocation4 + $0x38] sm:$0xff] %v1277
      %1308 = vst [vmem:[#allocation4 + $0x40] sm:$0xff] %v1296
      %1309 = vst [vmem:[#allocation4 + $0x48] sm:$0xff] %v1260
      %1310 = vst [vmem:[#allocation4 + $0x50] sm:$0xff] %v1279
      %1311 = vst [vmem:[#allocation4 + $0x58] sm:$0xff] %v1298
      %v1312 = vld [vmem:[%s6] sm:$0xff]
      %v1313 = vld [vmem:[%s6 + $0x8] sm:$0xf]
      %v1314 = vld [vmem:[%s6 + $0xc] sm:$0xff]
      %v1315 = vld [vmem:[%s6 + $0x14] sm:$0xf]
      %v1316 = vld [vmem:[%s6 + $0x18] sm:$0xff]
      %v1317 = vld [vmem:[%s6 + $0x20] sm:$0xf]
      %v1318 = vld [vmem:[%s6 + $0x24] sm:$0xff]
      %v1319 = vld [vmem:[%s6 + $0x2c] sm:$0xf]
      %v1320 = vld [vmem:[%s6 + $0x30] sm:$0xff]
      %v1321 = vld [vmem:[%s6 + $0x38] sm:$0xf]
      %v1322 = vld [vmem:[%s6 + $0x3c] sm:$0xff]
      %v1323 = vld [vmem:[%s6 + $0x44] sm:$0xf]
      %v1324 = vld [vmem:[%s6 + $0x48] sm:$0xff]
      %v1325 = vld [vmem:[%s6 + $0x50] sm:$0xf]
      %v1326 = vld [vmem:[%s6 + $0x54] sm:$0xff]
      %v1327 = vld [vmem:[%s6 + $0x5c] sm:$0xf]
      %v1328 = vld [vmem:[%s6 + $0x60] sm:$0xff]
      %v1329 = vld [vmem:[%s6 + $0x68] sm:$0xf]
      %v1330 = vld [vmem:[%s6 + $0x6c] sm:$0xff]
      %v1331 = vld [vmem:[%s6 + $0x74] sm:$0xf]
      %v1332 = vld [vmem:[%s6 + $0x78] sm:$0xff]
      %v1333 = vld [vmem:[%s6 + $0x80] sm:$0xf]
      %v1334 = vld [vmem:[%s6 + $0x84] sm:$0xff]
      %v1335 = vld [vmem:[%s6 + $0x8c] sm:$0xf]
      %v1336 = vld [vmem:[%s6 + $0x90] sm:$0xff]
      %v1337 = vld [vmem:[%s6 + $0x98] sm:$0xf]
      %v1338 = vld [vmem:[%s6 + $0x9c] sm:$0xff]
      %v1339 = vld [vmem:[%s6 + $0xa4] sm:$0xf]
      %v1340 = vld [vmem:[%s6 + $0xa8] sm:$0xff]
      %v1341 = vld [vmem:[%s6 + $0xb0] sm:$0xf]
      %v1342 = vld [vmem:[%s6 + $0xb4] sm:$0xff]
      %v1343 = vld [vmem:[%s6 + $0xbc] sm:$0xf]
      %v1344 = vld [vmem:[%s8] sm:$0x1]
      %s1345 = scalar_lea.vmem [#allocation2], 8
      %v1346 = vld [vmem:[%s1345] sm:$0xff]
      %v1347 = vpack.c.bf16 %v1346, %v1346
      %v1380 = vunpack.c.l.b16 %v1312
      %v1381 = vunpack.c.h.b16 %v1312
      %v1382 = vunpack.c.l.b16 %v1313
      %v1383 = vunpack.c.l.b16 %v1314
      %v1384 = vunpack.c.h.b16 %v1314
      %v1385 = vunpack.c.l.b16 %v1315
      %v1386 = vunpack.c.l.b16 %v1316
      %v1387 = vunpack.c.h.b16 %v1316
      %v1388 = vunpack.c.l.b16 %v1317
      %v1389 = vunpack.c.l.b16 %v1318
      %v1390 = vunpack.c.h.b16 %v1318
      %v1391 = vunpack.c.l.b16 %v1319
      %v1392 = vunpack.c.l.b16 %v1320
      %v1393 = vunpack.c.h.b16 %v1320
      %v1394 = vunpack.c.l.b16 %v1321
      %v1395 = vunpack.c.l.b16 %v1322
      %v1396 = vunpack.c.h.b16 %v1322
      %v1397 = vunpack.c.l.b16 %v1323
      %v1398 = vunpack.c.l.b16 %v1324
      %v1399 = vunpack.c.h.b16 %v1324
      %v1400 = vunpack.c.l.b16 %v1325
      %v1401 = vunpack.c.l.b16 %v1326
      %v1402 = vunpack.c.h.b16 %v1326
      %v1403 = vunpack.c.l.b16 %v1327
      %v1404 = vunpack.c.l.b16 %v1328
      %v1405 = vunpack.c.h.b16 %v1328
      %v1406 = vunpack.c.l.b16 %v1329
      %v1407 = vunpack.c.l.b16 %v1330
      %v1408 = vunpack.c.h.b16 %v1330
      %v1409 = vunpack.c.l.b16 %v1331
      %v1410 = vunpack.c.l.b16 %v1332
      %v1411 = vunpack.c.h.b16 %v1332
      %v1412 = vunpack.c.l.b16 %v1333
      %v1413 = vunpack.c.l.b16 %v1334
      %v1414 = vunpack.c.h.b16 %v1334
      %v1415 = vunpack.c.l.b16 %v1335
      %v1416 = vunpack.c.l.b16 %v1336
      %v1417 = vunpack.c.h.b16 %v1336
      %v1418 = vunpack.c.l.b16 %v1337
      %v1419 = vunpack.c.l.b16 %v1338
      %v1420 = vunpack.c.h.b16 %v1338
      %v1421 = vunpack.c.l.b16 %v1339
      %v1422 = vunpack.c.l.b16 %v1340
      %v1423 = vunpack.c.h.b16 %v1340
      %v1424 = vunpack.c.l.b16 %v1341
      %v1425 = vunpack.c.l.b16 %v1342
      %v1426 = vunpack.c.h.b16 %v1342
      %v1427 = vunpack.c.l.b16 %v1343
      %v1428 = vpack.c.b16 %v1383, %v1380
      %v1429 = vpack.c.b16 %v1384, %v1381
      %v1430 = vpack.c.b16 %v1385, %v1382
      %v1431 = vpack.c.b16 %v1389, %v1386
      %v1432 = vpack.c.b16 %v1390, %v1387
      %v1433 = vpack.c.b16 %v1391, %v1388
      %v1434 = vpack.c.b16 %v1395, %v1392
      %v1435 = vpack.c.b16 %v1396, %v1393
      %v1436 = vpack.c.b16 %v1397, %v1394
      %v1437 = vpack.c.b16 %v1401, %v1398
      %v1438 = vpack.c.b16 %v1402, %v1399
      %v1439 = vpack.c.b16 %v1403, %v1400
      %v1440 = vpack.c.b16 %v1407, %v1404
      %v1441 = vpack.c.b16 %v1408, %v1405
      %v1442 = vpack.c.b16 %v1409, %v1406
      %v1443 = vpack.c.b16 %v1413, %v1410
      %v1444 = vpack.c.b16 %v1414, %v1411
      %v1445 = vpack.c.b16 %v1415, %v1412
      %v1446 = vpack.c.b16 %v1419, %v1416
      %v1447 = vpack.c.b16 %v1420, %v1417
      %v1448 = vpack.c.b16 %v1421, %v1418
      %v1449 = vpack.c.b16 %v1425, %v1422
      %v1450 = vpack.c.b16 %v1426, %v1423
      %v1451 = vpack.c.b16 %v1427, %v1424
      %1476 = vmatpush.bf16.msra.mxu0 %v1449
      %1477 = vmatpush.bf16.msra.mxu0 %v1446
      %1478 = vmatpush.bf16.msra.mxu0 %v1443
      %1479 = vmatpush.bf16.msra.mxu0 %v1440
      %1480 = vmatpush.bf16.msra.mxu0 %v1437
      %1481 = vmatpush.bf16.msra.mxu0 %v1434
      %1482 = vmatpush.bf16.msra.mxu0 %v1431
      %1483 = vmatpush.bf16.msra.mxu0 %v1428
      %1484 = vmatmul.bf16.gmra.mxu0 %v1347
      %v1485 = vpop.f32.mrf.mxu0
      %v1486 = vadd.f32 0.0, %v1485
      %v1487 = vpop.f32.mrf.mxu0
      %1488 = vdwg.mxu0
      %1489 = vmatpush.bf16.msra.mxu0 %v1450
      %1490 = vmatpush.bf16.msra.mxu0 %v1447
      %1491 = vmatpush.bf16.msra.mxu0 %v1444
      %1492 = vmatpush.bf16.msra.mxu0 %v1441
      %1493 = vmatpush.bf16.msra.mxu0 %v1438
      %1494 = vmatpush.bf16.msra.mxu0 %v1435
      %1495 = vmatpush.bf16.msra.mxu0 %v1432
      %1496 = vmatpush.bf16.msra.mxu0 %v1429
      %1497 = vmatmul.bf16.gmra.mxu0 %v1347
      %v1498 = vpop.f32.mrf.mxu0
      %v1499 = vadd.f32 0.0, %v1498
      %v1500 = vpop.f32.mrf.mxu0
      %1501 = vdwg.mxu0
      %1502 = vmatpush.bf16.msra.mxu0 %v1451
      %1503 = vmatpush.bf16.msra.mxu0 %v1448
      %1504 = vmatpush.bf16.msra.mxu0 %v1445
      %1505 = vmatpush.bf16.msra.mxu0 %v1442
      %1506 = vmatpush.bf16.msra.mxu0 %v1439
      %1507 = vmatpush.bf16.msra.mxu0 %v1436
      %1508 = vmatpush.bf16.msra.mxu0 %v1433
      %1509 = vmatpush.bf16.msra.mxu0 %v1430
      %1510 = vmatmul.bf16.gmra.mxu0 %v1347
      %v1511 = vpop.f32.mrf.mxu0
      %v1512 = vadd.f32 0.0, %v1511
      %v1513 = vpop.f32.mrf.mxu0
      %1514 = vdwg.mxu0
      %v1515 = vld [vmem:[%s704] sm:$0xff]
      %v1516 = vld [vmem:[%s704 + $0x8] sm:$0xff]
      %v1517 = vld [vmem:[%s704 + $0x10] sm:$0xff]
      %v1518 = vadd.f32 %v1515, %v1486
      %v1519 = vxor.u32 %v1518, 2147483648
      %v1520 = vmul.f32 %v1519, 1.442695
      %v1521 = vpow.pop %v1520
      %v1522 = vadd.f32 %v1521, 1.0
      %v1523 = vrcp.pop %v1522
      %v1524 = vmul.f32 %v1522, %v1523
      %v1525 = vsub.f32 1.0, %v1524
      %v1526 = vmul.f32 %v1523, %v1525
      %v1527 = vadd.f32 %v1523, %v1526
      %vm1528 = vweird.f32 %v1522
      %vm1529 = vweird.f32 %v1523
      %vm1530 = vmor %vm1528, %vm1529
      %v1531 = vsel %vm1530, %v1523, %v1527
      %v1532 = vand.u32 2147483647, %v1522
      %vm1533 = vcmp.eq.f32.partialorder %v1532, 8.507059e+37
      %v1534 = vand.u32 %v1522, 2147483648
      %v1535 = vor.u32 1.1754944e-38, %v1534
      %v1536 = vsel %vm1533, %v1535, %v1531
      %v1537 = vmul.f32 1.0, %v1536
      %v1538 = vadd.f32 %v1516, %v1499
      %v1539 = vxor.u32 %v1538, 2147483648
      %v1540 = vmul.f32 %v1539, 1.442695
      %v1541 = vpow.pop %v1540
      %v1542 = vadd.f32 %v1541, 1.0
      %v1543 = vrcp.pop %v1542
      %v1544 = vmul.f32 %v1542, %v1543
      %v1545 = vsub.f32 1.0, %v1544
      %v1546 = vmul.f32 %v1543, %v1545
      %v1547 = vadd.f32 %v1543, %v1546
      %vm1548 = vweird.f32 %v1542
      %vm1549 = vweird.f32 %v1543
      %vm1550 = vmor %vm1548, %vm1549
      %v1551 = vsel %vm1550, %v1543, %v1547
      %v1552 = vand.u32 2147483647, %v1542
      %vm1553 = vcmp.eq.f32.partialorder %v1552, 8.507059e+37
      %v1554 = vand.u32 %v1542, 2147483648
      %v1555 = vor.u32 1.1754944e-38, %v1554
      %v1556 = vsel %vm1553, %v1555, %v1551
      %v1557 = vmul.f32 1.0, %v1556
      %v1559 = vperm.slane %v1344, 0
      %v1561 = vadd.f32 %v1512, %v1559
      %v1562 = vmul.f32 %v1537, %v1561
      %v1563 = vadd.f32 %v1517, %v1562
      %v1564 = vtanh.pop %v1563
      %v1565 = vsub.f32 1.0, %v1557
      %v1566 = vmul.f32 %v1565, %v1564
      %v1567 = vmul.f32 %v1557, %v1346
      %v1568 = vadd.f32 %v1566, %v1567
      %1569 = vst [vmem:[%s1345] sm:$0xff] %v1568
      %v1570 = vld [vmem:[#allocation3] sm:$0xff]
      %v1571 = vtanh.pop %v1568
      %v1572 = vmax.f32 %v1570, %v1571
      %1573 = vst [vmem:[#allocation3] sm:$0xff] %v1572
      %v1574 = vld [vmem:[%s1345] sm:$0xff]
      %v1575 = vpack.c.bf16 %v1574, %v1574
      %1576 = vmatpush.bf16.msra.mxu0 %v1449
      %1577 = vmatpush.bf16.msra.mxu0 %v1446
      %1578 = vmatpush.bf16.msra.mxu0 %v1443
      %1579 = vmatpush.bf16.msra.mxu0 %v1440
      %1580 = vmatpush.bf16.msra.mxu0 %v1437
      %1581 = vmatpush.bf16.msra.mxu0 %v1434
      %1582 = vmatpush.bf16.msra.mxu0 %v1431
      %1583 = vmatpush.bf16.msra.mxu0 %v1428
      %1584 = vmatmul.bf16.gmra.mxu0 %v1575
      %v1585 = vpop.f32.mrf.mxu0
      %v1586 = vadd.f32 0.0, %v1585
      %v1587 = vpop.f32.mrf.mxu0
      %1588 = vdwg.mxu0
      %1589 = vmatpush.bf16.msra.mxu0 %v1450
      %1590 = vmatpush.bf16.msra.mxu0 %v1447
      %1591 = vmatpush.bf16.msra.mxu0 %v1444
      %1592 = vmatpush.bf16.msra.mxu0 %v1441
      %1593 = vmatpush.bf16.msra.mxu0 %v1438
      %1594 = vmatpush.bf16.msra.mxu0 %v1435
      %1595 = vmatpush.bf16.msra.mxu0 %v1432
      %1596 = vmatpush.bf16.msra.mxu0 %v1429
      %1597 = vmatmul.bf16.gmra.mxu0 %v1575
      %v1598 = vpop.f32.mrf.mxu0
      %v1599 = vadd.f32 0.0, %v1598
      %v1600 = vpop.f32.mrf.mxu0
      %1601 = vdwg.mxu0
      %1602 = vmatpush.bf16.msra.mxu0 %v1451
      %1603 = vmatpush.bf16.msra.mxu0 %v1448
      %1604 = vmatpush.bf16.msra.mxu0 %v1445
      %1605 = vmatpush.bf16.msra.mxu0 %v1442
      %1606 = vmatpush.bf16.msra.mxu0 %v1439
      %1607 = vmatpush.bf16.msra.mxu0 %v1436
      %1608 = vmatpush.bf16.msra.mxu0 %v1433
      %1609 = vmatpush.bf16.msra.mxu0 %v1430
      %1610 = vmatmul.bf16.gmra.mxu0 %v1575
      %v1611 = vpop.f32.mrf.mxu0
      %v1612 = vadd.f32 0.0, %v1611
      %v1613 = vpop.f32.mrf.mxu0
      %1614 = vdwg.mxu0
      %v1615 = vld [vmem:[%s805] sm:$0xff]
      %v1616 = vld [vmem:[%s805 + $0x8] sm:$0xff]
      %v1617 = vld [vmem:[%s805 + $0x10] sm:$0xff]
      %v1618 = vadd.f32 %v1615, %v1586
      %v1619 = vxor.u32 %v1618, 2147483648
      %v1620 = vmul.f32 %v1619, 1.442695
      %v1621 = vpow.pop %v1620
      %v1622 = vadd.f32 %v1621, 1.0
      %v1623 = vrcp.pop %v1622
      %v1624 = vmul.f32 %v1622, %v1623
      %v1625 = vsub.f32 1.0, %v1624
      %v1626 = vmul.f32 %v1623, %v1625
      %v1627 = vadd.f32 %v1623, %v1626
      %vm1628 = vweird.f32 %v1622
      %vm1629 = vweird.f32 %v1623
      %vm1630 = vmor %vm1628, %vm1629
      %v1631 = vsel %vm1630, %v1623, %v1627
      %v1632 = vand.u32 2147483647, %v1622
      %vm1633 = vcmp.eq.f32.partialorder %v1632, 8.507059e+37
      %v1634 = vand.u32 %v1622, 2147483648
      %v1635 = vor.u32 1.1754944e-38, %v1634
      %v1636 = vsel %vm1633, %v1635, %v1631
      %v1637 = vmul.f32 1.0, %v1636
      %v1638 = vadd.f32 %v1616, %v1599
      %v1639 = vxor.u32 %v1638, 2147483648
      %v1640 = vmul.f32 %v1639, 1.442695
      %v1641 = vpow.pop %v1640
      %v1642 = vadd.f32 %v1641, 1.0
      %v1643 = vrcp.pop %v1642
      %v1644 = vmul.f32 %v1642, %v1643
      %v1645 = vsub.f32 1.0, %v1644
      %v1646 = vmul.f32 %v1643, %v1645
      %v1647 = vadd.f32 %v1643, %v1646
      %vm1648 = vweird.f32 %v1642
      %vm1649 = vweird.f32 %v1643
      %vm1650 = vmor %vm1648, %vm1649
      %v1651 = vsel %vm1650, %v1643, %v1647
      %v1652 = vand.u32 2147483647, %v1642
      %vm1653 = vcmp.eq.f32.partialorder %v1652, 8.507059e+37
      %v1654 = vand.u32 %v1642, 2147483648
      %v1655 = vor.u32 1.1754944e-38, %v1654
      %v1656 = vsel %vm1653, %v1655, %v1651
      %v1657 = vmul.f32 1.0, %v1656
      %v1658 = vadd.f32 %v1612, %v1559
      %v1659 = vmul.f32 %v1637, %v1658
      %v1660 = vadd.f32 %v1617, %v1659
      %v1661 = vtanh.pop %v1660
      %v1662 = vsub.f32 1.0, %v1657
      %v1663 = vmul.f32 %v1662, %v1661
      %v1664 = vmul.f32 %v1657, %v1574
      %v1665 = vadd.f32 %v1663, %v1664
      %1666 = vst [vmem:[%s1345] sm:$0xff] %v1665
      %v1667 = vld [vmem:[#allocation3] sm:$0xff]
      %v1668 = vtanh.pop %v1665
      %v1669 = vmax.f32 %v1667, %v1668
      %1670 = vst [vmem:[#allocation3] sm:$0xff] %v1669
      %v1671 = vld [vmem:[%s1345] sm:$0xff]
      %v1672 = vpack.c.bf16 %v1671, %v1671
      %1673 = vmatpush.bf16.msra.mxu0 %v1449
      %1674 = vmatpush.bf16.msra.mxu0 %v1446
      %1675 = vmatpush.bf16.msra.mxu0 %v1443
      %1676 = vmatpush.bf16.msra.mxu0 %v1440
      %1677 = vmatpush.bf16.msra.mxu0 %v1437
      %1678 = vmatpush.bf16.msra.mxu0 %v1434
      %1679 = vmatpush.bf16.msra.mxu0 %v1431
      %1680 = vmatpush.bf16.msra.mxu0 %v1428
      %1681 = vmatmul.bf16.gmra.mxu0 %v1672
      %v1682 = vpop.f32.mrf.mxu0
      %v1683 = vadd.f32 0.0, %v1682
      %v1684 = vpop.f32.mrf.mxu0
      %1685 = vdwg.mxu0
      %1686 = vmatpush.bf16.msra.mxu0 %v1450
      %1687 = vmatpush.bf16.msra.mxu0 %v1447
      %1688 = vmatpush.bf16.msra.mxu0 %v1444
      %1689 = vmatpush.bf16.msra.mxu0 %v1441
      %1690 = vmatpush.bf16.msra.mxu0 %v1438
      %1691 = vmatpush.bf16.msra.mxu0 %v1435
      %1692 = vmatpush.bf16.msra.mxu0 %v1432
      %1693 = vmatpush.bf16.msra.mxu0 %v1429
      %1694 = vmatmul.bf16.gmra.mxu0 %v1672
      %v1695 = vpop.f32.mrf.mxu0
      %v1696 = vadd.f32 0.0, %v1695
      %v1697 = vpop.f32.mrf.mxu0
      %1698 = vdwg.mxu0
      %1699 = vmatpush.bf16.msra.mxu0 %v1451
      %1700 = vmatpush.bf16.msra.mxu0 %v1448
      %1701 = vmatpush.bf16.msra.mxu0 %v1445
      %1702 = vmatpush.bf16.msra.mxu0 %v1442
      %1703 = vmatpush.bf16.msra.mxu0 %v1439
      %1704 = vmatpush.bf16.msra.mxu0 %v1436
      %1705 = vmatpush.bf16.msra.mxu0 %v1433
      %1706 = vmatpush.bf16.msra.mxu0 %v1430
      %1707 = vmatmul.bf16.gmra.mxu0 %v1672
      %v1708 = vpop.f32.mrf.mxu0
      %v1709 = vadd.f32 0.0, %v1708
      %v1710 = vpop.f32.mrf.mxu0
      %1711 = vdwg.mxu0
      %v1712 = vld [vmem:[%s904] sm:$0xff]
      %v1713 = vld [vmem:[%s904 + $0x8] sm:$0xff]
      %v1714 = vld [vmem:[%s904 + $0x10] sm:$0xff]
      %v1715 = vadd.f32 %v1712, %v1683
      %v1716 = vxor.u32 %v1715, 2147483648
      %v1717 = vmul.f32 %v1716, 1.442695
      %v1718 = vpow.pop %v1717
      %v1719 = vadd.f32 %v1718, 1.0
      %v1720 = vrcp.pop %v1719
      %v1721 = vmul.f32 %v1719, %v1720
      %v1722 = vsub.f32 1.0, %v1721
      %v1723 = vmul.f32 %v1720, %v1722
      %v1724 = vadd.f32 %v1720, %v1723
      %vm1725 = vweird.f32 %v1719
      %vm1726 = vweird.f32 %v1720
      %vm1727 = vmor %vm1725, %vm1726
      %v1728 = vsel %vm1727, %v1720, %v1724
      %v1729 = vand.u32 2147483647, %v1719
      %vm1730 = vcmp.eq.f32.partialorder %v1729, 8.507059e+37
      %v1731 = vand.u32 %v1719, 2147483648
      %v1732 = vor.u32 1.1754944e-38, %v1731
      %v1733 = vsel %vm1730, %v1732, %v1728
      %v1734 = vmul.f32 1.0, %v1733
      %v1735 = vadd.f32 %v1713, %v1696
      %v1736 = vxor.u32 %v1735, 2147483648
      %v1737 = vmul.f32 %v1736, 1.442695
      %v1738 = vpow.pop %v1737
      %v1739 = vadd.f32 %v1738, 1.0
      %v1740 = vrcp.pop %v1739
      %v1741 = vmul.f32 %v1739, %v1740
      %v1742 = vsub.f32 1.0, %v1741
      %v1743 = vmul.f32 %v1740, %v1742
      %v1744 = vadd.f32 %v1740, %v1743
      %vm1745 = vweird.f32 %v1739
      %vm1746 = vweird.f32 %v1740
      %vm1747 = vmor %vm1745, %vm1746
      %v1748 = vsel %vm1747, %v1740, %v1744
      %v1749 = vand.u32 2147483647, %v1739
      %vm1750 = vcmp.eq.f32.partialorder %v1749, 8.507059e+37
      %v1751 = vand.u32 %v1739, 2147483648
      %v1752 = vor.u32 1.1754944e-38, %v1751
      %v1753 = vsel %vm1750, %v1752, %v1748
      %v1754 = vmul.f32 1.0, %v1753
      %v1755 = vadd.f32 %v1709, %v1559
      %v1756 = vmul.f32 %v1734, %v1755
      %v1757 = vadd.f32 %v1714, %v1756
      %v1758 = vtanh.pop %v1757
      %v1759 = vsub.f32 1.0, %v1754
      %v1760 = vmul.f32 %v1759, %v1758
      %v1761 = vmul.f32 %v1754, %v1671
      %v1762 = vadd.f32 %v1760, %v1761
      %1763 = vst [vmem:[%s1345] sm:$0xff] %v1762
      %v1764 = vld [vmem:[#allocation3] sm:$0xff]
      %v1765 = vtanh.pop %v1762
      %v1766 = vmax.f32 %v1764, %v1765
      %1767 = vst [vmem:[#allocation3] sm:$0xff] %v1766
      %v1768 = vld [vmem:[%s1345] sm:$0xff]
      %v1769 = vpack.c.bf16 %v1768, %v1768
      %1770 = vmatpush.bf16.msra.mxu0 %v1449
      %1771 = vmatpush.bf16.msra.mxu0 %v1446
      %1772 = vmatpush.bf16.msra.mxu0 %v1443
      %1773 = vmatpush.bf16.msra.mxu0 %v1440
      %1774 = vmatpush.bf16.msra.mxu0 %v1437
      %1775 = vmatpush.bf16.msra.mxu0 %v1434
      %1776 = vmatpush.bf16.msra.mxu0 %v1431
      %1777 = vmatpush.bf16.msra.mxu0 %v1428
      %1778 = vmatmul.bf16.gmra.mxu0 %v1769
      %v1779 = vpop.f32.mrf.mxu0
      %v1780 = vadd.f32 0.0, %v1779
      %v1781 = vpop.f32.mrf.mxu0
      %1782 = vdwg.mxu0
      %1783 = vmatpush.bf16.msra.mxu0 %v1450
      %1784 = vmatpush.bf16.msra.mxu0 %v1447
      %1785 = vmatpush.bf16.msra.mxu0 %v1444
      %1786 = vmatpush.bf16.msra.mxu0 %v1441
      %1787 = vmatpush.bf16.msra.mxu0 %v1438
      %1788 = vmatpush.bf16.msra.mxu0 %v1435
      %1789 = vmatpush.bf16.msra.mxu0 %v1432
      %1790 = vmatpush.bf16.msra.mxu0 %v1429
      %1791 = vmatmul.bf16.gmra.mxu0 %v1769
      %v1792 = vpop.f32.mrf.mxu0
      %v1793 = vadd.f32 0.0, %v1792
      %v1794 = vpop.f32.mrf.mxu0
      %1795 = vdwg.mxu0
      %1796 = vmatpush.bf16.msra.mxu0 %v1451
      %1797 = vmatpush.bf16.msra.mxu0 %v1448
      %1798 = vmatpush.bf16.msra.mxu0 %v1445
      %1799 = vmatpush.bf16.msra.mxu0 %v1442
      %1800 = vmatpush.bf16.msra.mxu0 %v1439
      %1801 = vmatpush.bf16.msra.mxu0 %v1436
      %1802 = vmatpush.bf16.msra.mxu0 %v1433
      %1803 = vmatpush.bf16.msra.mxu0 %v1430
      %1804 = vmatmul.bf16.gmra.mxu0 %v1769
      %v1805 = vpop.f32.mrf.mxu0
      %v1806 = vadd.f32 0.0, %v1805
      %v1807 = vpop.f32.mrf.mxu0
      %1808 = vdwg.mxu0
      %v1809 = vld [vmem:[%s1003] sm:$0xff]
      %v1810 = vld [vmem:[%s1003 + $0x8] sm:$0xff]
      %v1811 = vld [vmem:[%s1003 + $0x10] sm:$0xff]
      %v1812 = vadd.f32 %v1809, %v1780
      %v1813 = vxor.u32 %v1812, 2147483648
      %v1814 = vmul.f32 %v1813, 1.442695
      %v1815 = vpow.pop %v1814
      %v1816 = vadd.f32 %v1815, 1.0
      %v1817 = vrcp.pop %v1816
      %v1818 = vmul.f32 %v1816, %v1817
      %v1819 = vsub.f32 1.0, %v1818
      %v1820 = vmul.f32 %v1817, %v1819
      %v1821 = vadd.f32 %v1817, %v1820
      %vm1822 = vweird.f32 %v1816
      %vm1823 = vweird.f32 %v1817
      %vm1824 = vmor %vm1822, %vm1823
      %v1825 = vsel %vm1824, %v1817, %v1821
      %v1826 = vand.u32 2147483647, %v1816
      %vm1827 = vcmp.eq.f32.partialorder %v1826, 8.507059e+37
      %v1828 = vand.u32 %v1816, 2147483648
      %v1829 = vor.u32 1.1754944e-38, %v1828
      %v1830 = vsel %vm1827, %v1829, %v1825
      %v1831 = vmul.f32 1.0, %v1830
      %v1832 = vadd.f32 %v1810, %v1793
      %v1833 = vxor.u32 %v1832, 2147483648
      %v1834 = vmul.f32 %v1833, 1.442695
      %v1835 = vpow.pop %v1834
      %v1836 = vadd.f32 %v1835, 1.0
      %v1837 = vrcp.pop %v1836
      %v1838 = vmul.f32 %v1836, %v1837
      %v1839 = vsub.f32 1.0, %v1838
      %v1840 = vmul.f32 %v1837, %v1839
      %v1841 = vadd.f32 %v1837, %v1840
      %vm1842 = vweird.f32 %v1836
      %vm1843 = vweird.f32 %v1837
      %vm1844 = vmor %vm1842, %vm1843
      %v1845 = vsel %vm1844, %v1837, %v1841
      %v1846 = vand.u32 2147483647, %v1836
      %vm1847 = vcmp.eq.f32.partialorder %v1846, 8.507059e+37
      %v1848 = vand.u32 %v1836, 2147483648
      %v1849 = vor.u32 1.1754944e-38, %v1848
      %v1850 = vsel %vm1847, %v1849, %v1845
      %v1851 = vmul.f32 1.0, %v1850
      %v1852 = vadd.f32 %v1806, %v1559
      %v1853 = vmul.f32 %v1831, %v1852
      %v1854 = vadd.f32 %v1811, %v1853
      %v1855 = vtanh.pop %v1854
      %v1856 = vsub.f32 1.0, %v1851
      %v1857 = vmul.f32 %v1856, %v1855
      %v1858 = vmul.f32 %v1851, %v1768
      %v1859 = vadd.f32 %v1857, %v1858
      %1860 = vst [vmem:[%s1345] sm:$0xff] %v1859
      %v1861 = vld [vmem:[#allocation3] sm:$0xff]
      %v1862 = vtanh.pop %v1859
      %v1863 = vmax.f32 %v1861, %v1862
      %1864 = vst [vmem:[#allocation3] sm:$0xff] %v1863
      %p1865 = scmp.eq.s32.totalorder %s22, 1
      // Predicated region
      $region69: #{gru_model_forward.1} parent=63 // pred_check
        %p1866 = pneg %p1865
      $region70: #{gru_model_forward.1} parent=63 // pred_check_branch
        %1868 = sbr.rel (%p1866) target = $region72
      $region71: #{gru_model_forward.1} parent=63 // pred_region
        %v1869 = vld [vmem:[#allocation3] sm:$0xff]
        %v1870 = vtanh.pop %v1869
        %v1871 = vpack.c.bf16 %v1870, %v1870
        %v1872 = vld [vmem:[%s9] sm:$0xf]
        %v1873 = vld [vmem:[%s9 + $0x4] sm:$0xf]
        %v1874 = vld [vmem:[%s9 + $0x8] sm:$0xf]
        %v1875 = vld [vmem:[%s9 + $0xc] sm:$0xf]
        %v1876 = vld [vmem:[%s9 + $0x10] sm:$0xf]
        %v1877 = vld [vmem:[%s9 + $0x14] sm:$0xf]
        %v1878 = vld [vmem:[%s9 + $0x18] sm:$0xf]
        %v1879 = vld [vmem:[%s9 + $0x1c] sm:$0xf]
        %v1880 = vld [vmem:[%s9 + $0x20] sm:$0xf]
        %v1881 = vld [vmem:[%s9 + $0x24] sm:$0xf]
        %v1882 = vld [vmem:[%s9 + $0x28] sm:$0xf]
        %v1883 = vld [vmem:[%s9 + $0x2c] sm:$0xf]
        %v1884 = vld [vmem:[%s9 + $0x30] sm:$0xf]
        %v1885 = vld [vmem:[%s9 + $0x34] sm:$0xf]
        %v1886 = vld [vmem:[%s9 + $0x38] sm:$0xf]
        %v1887 = vld [vmem:[%s9 + $0x3c] sm:$0xf]
        %v1888 = vld [vmem:[%s10] sm:$0x1]
        %v1890 = vperm.slane %v1888, 0
        %v1908 = vunpack.c.l.b16 %v1872
        %v1909 = vunpack.c.l.b16 %v1873
        %v1910 = vunpack.c.l.b16 %v1874
        %v1911 = vunpack.c.l.b16 %v1875
        %v1912 = vunpack.c.l.b16 %v1876
        %v1913 = vunpack.c.l.b16 %v1877
        %v1914 = vunpack.c.l.b16 %v1878
        %v1915 = vunpack.c.l.b16 %v1879
        %v1916 = vunpack.c.l.b16 %v1880
        %v1917 = vunpack.c.l.b16 %v1881
        %v1918 = vunpack.c.l.b16 %v1882
        %v1919 = vunpack.c.l.b16 %v1883
        %v1920 = vunpack.c.l.b16 %v1884
        %v1921 = vunpack.c.l.b16 %v1885
        %v1922 = vunpack.c.l.b16 %v1886
        %v1923 = vunpack.c.l.b16 %v1887
        %v1924 = vpack.c.b16 %v1909, %v1908
        %v1925 = vpack.c.b16 %v1911, %v1910
        %v1926 = vpack.c.b16 %v1913, %v1912
        %v1927 = vpack.c.b16 %v1915, %v1914
        %v1928 = vpack.c.b16 %v1917, %v1916
        %v1929 = vpack.c.b16 %v1919, %v1918
        %v1930 = vpack.c.b16 %v1921, %v1920
        %v1931 = vpack.c.b16 %v1923, %v1922
        %1940 = vmatpush.bf16.msra.mxu0 %v1931
        %1941 = vmatpush.bf16.msra.mxu0 %v1930
        %1942 = vmatpush.bf16.msra.mxu0 %v1929
        %1943 = vmatpush.bf16.msra.mxu0 %v1928
        %1944 = vmatpush.bf16.msra.mxu0 %v1927
        %1945 = vmatpush.bf16.msra.mxu0 %v1926
        %1946 = vmatpush.bf16.msra.mxu0 %v1925
        %1947 = vmatpush.bf16.msra.mxu0 %v1924
        %1948 = vmatmul.bf16.gmra.mxu0 %v1871
        %v1949 = vpop.f32.mrf.mxu0
        %v1950 = vadd.f32 %v1890, %v1949
        %v1951 = vpop.f32.mrf.mxu0
        %1952 = vdwg.mxu0
        %1953 = vst [vmem:[%s11] sm:$0xff] %v1950
      $region72: #{gru_model_forward.1} parent=63 // pred_fallthru
        _
      // Predicated region
      $region73: #{gru_model_forward.1} parent=63 // pred_check
        %p1954 = pneg %p271
      $region74: #{gru_model_forward.1} parent=63 // pred_check_branch
        %1956 = sbr.rel (%p1954) target = $region76
      $region75: #{gru_model_forward.1} parent=63 // pred_region
        _
      $region76: #{gru_model_forward.1} parent=63 // pred_fallthru
        _
      // Predicated region
      $region77: #{gru_model_forward.1} parent=63 // pred_check
        %p1957 = pneg %p271
      $region78: #{gru_model_forward.1} parent=63 // pred_check_branch
        %1959 = sbr.rel (%p1957) target = $region80
      $region79: #{gru_model_forward.1} parent=63 // pred_region
        _
      $region80: #{gru_model_forward.1} parent=63 // pred_fallthru
        _
    $region64: #{gru_model_forward.1} parent=5 // pred_fallthru
      _
    %p1960 = scmp.le.s32.totalorder 2, %s17
    // Predicated region
    $region81: #{gru_model_forward.1} parent=5 // pred_check
      %p1961 = pneg %p1960
    $region82: #{gru_model_forward.1} parent=5 // pred_check_branch
      %1963 = sbr.rel (%p1961) target = $region84
    $region83: #{gru_model_forward.1} parent=5 // pred_region
      %s1964 = ssub.s32 %s17, 2
    $region84: #{gru_model_forward.1} parent=5 // pred_fallthru
      _
  $region6: #{gru_model_forward.1} parent=0 // loop_footer
    %s21 = sadd.s32 1, %s17
  $region7: #{gru_model_forward.1} parent=0 // loop_footer_branch
    %16 = sbr.rel target = $region3
  $region8: #{gru_model_forward.1} parent=0 // loop_exit
    _

</llo_original>
